<compile_context>
chip_gen: v7x
topology: tpu7x:2x2x1
jax: 0.10.0
libtpu: 0.0.40
codegen_flags: <defaults>
</compile_context>

<pallas_src>
import numpy as np
import jax
import jax.numpy as jnp
from jax import lax
from jax.experimental import pallas as pl
from jax.experimental.pallas import tpu as pltpu


def _round_up(x, m):
    return (x + m - 1) // m * m


def _cdiv(a, b):
    return -(-a // b)


def _vmem_limits():
    """Returns (vmem_limit_bytes for CompilerParams, byte budget for tiles)."""
    cap = 64 * 1024 * 1024                    # v7x floor; v5e/v6e have 128 MiB
    try:
        info = pltpu.get_tpu_info()
        cap = int(getattr(info, "vmem_capacity_bytes", cap)) or cap
    except Exception:
        pass
    limit = min(cap * 3 // 4, 100 * 1024 * 1024)
    return limit, int(limit * 0.7)


# ----------------------------------------------------------------------------
# One TCN level: Conv3d(k=2, dilation=d, padding=d) + ReLU  (Dropout = id)
#
# The padded input (cin, Dp, Hp, Wp) is flattened to (cin, L).  For an output
# position m (flattened with the *padded* H/W strides), tap (kd,kh,kw) reads
# flat column m + off,  off = kd*d*Hp*Wp + kh*d*Wp + kw*d  (static per tap).
# The kernel gets an aligned bm-wide main tile plus an aligned halo tile
# covering [j*bm, j*bm + bm + halo_p) and accumulates the 8 tap matmuls
# W_tap(cout,cin) @ A_tap(cin,bm) in f32.  Columns with oh>=Ho / ow>=Wo are
# garbage (sliced off afterwards); valid columns are the exact convolution.
# ----------------------------------------------------------------------------
def _choose_level_bm(m_full, n_batch, cin, cout_p, halo_p, budget):
    # bytes per lane column: A tile (x2 buf, bf16) + out tile (x2, bf16)
    # + f32 accumulator + transient shifted tap slices.
    per_bm = 2 * 2 * cin + 2 * 2 * cout_p + 4 * cout_p + 2 * 2 * cin
    fixed = 2 * 2 * cin * halo_p + 2 * 2 * 8 * cout_p * cin + (2 << 20)
    cap = max(halo_p, (budget - fixed) // per_bm)
    cap = max(halo_p, min(cap, 2048) // halo_p * halo_p)
    ntiles = _cdiv(m_full, cap)
    max_tiles = _cdiv(m_full, halo_p)
    # enough grid steps for pipelining / both v7x TensorCores at tiny batch
    while n_batch * ntiles < 4 and ntiles < max_tiles:
        ntiles += 1
    return _round_up(_cdiv(m_full, ntiles), halo_p)


def _make_level_kernel(offs, bm):
    def kernel(xm_ref, xh_ref, w_ref, b_ref, o_ref):
        win = jnp.concatenate([xm_ref[0], xh_ref[0]], axis=-1)  # (cin, bm+halo)
        acc = None
        for t, off in enumerate(offs):                          # 8 static taps
            a = win[:, off:off + bm]                            # static slice
            p = jnp.dot(w_ref[t], a, preferred_element_type=jnp.float32)
            acc = p if acc is None else acc + p
        acc = jnp.maximum(acc + b_ref[...], 0.0)                # bias + ReLU
        o_ref[0] = acc.astype(o_ref.dtype)
    return kernel


def tcn_level(x, w, b, dilation, tile_budget, vmem_limit):
    """x: (n, cin, D, H, W); w: (cout, cin, 2, 2, 2); b: (cout,).
    Returns (n, cout, D+d, H+d, W+d) bf16."""
    n, cin, D, H, W = x.shape
    cout = w.shape[0]
    d = dilation
    Do, Ho, Wo = D + d, H + d, W + d
    Dp, Hp, Wp = D + 2 * d, H + 2 * d, W + 2 * d
    hpwp = Hp * Wp
    m_full = Do * hpwp                                # padded-layout output len
    offs = tuple(kd * d * hpwp + kh * d * Wp + kw * d
                 for kd in (0, 1) for kh in (0, 1) for kw in (0, 1))
    halo_p = _round_up(offs[-1] + 1, 128)             # offs[-1] == max offset

    cout_p = _round_up(cout, 16)
    bm = _choose_level_bm(m_full, n, cin, cout_p, halo_p, tile_budget)
    m_out = _round_up(m_full, bm)
    ntiles = m_out // bm

    # flat padded input must cover the last main tile + its halo tile
    l_needed = m_out + halo_p
    deficit = l_needed - Dp * hpwp
    extra_d = _cdiv(deficit, hpwp) if deficit > 0 else 0
    xp = jnp.pad(x.astype(jnp.bfloat16),
                 ((0, 0), (0, 0), (d, d + extra_d), (d, d), (d, d)))
    xflat = xp.reshape(n, cin, (Dp + extra_d) * hpwp)

    # per-tap weight matrices, tap order == offs order (kd, kh, kw)
    w_taps = jnp.transpose(w, (2, 3, 4, 0, 1)).reshape(8, cout, cin)
    if cout_p > cout:
        w_taps = jnp.pad(w_taps, ((0, 0), (0, cout_p - cout), (0, 0)))
    w_taps = w_taps.astype(jnp.bfloat16)
    bias = jnp.pad(b.astype(jnp.float32), (0, cout_p - cout)).reshape(cout_p, 1)

    r = bm // halo_p                                  # halo blocks per main tile
    out = pl.pallas_call(
        _make_level_kernel(offs, bm),
        out_shape=jax.ShapeDtypeStruct((n, cout_p, m_out), jnp.bfloat16),
        grid=(n, ntiles),
        in_specs=[
            pl.BlockSpec((1, cin, bm), lambda bi, j: (bi, 0, j)),           # main
            pl.BlockSpec((1, cin, halo_p),
                         lambda bi, j: (bi, 0, (j + 1) * r)),               # halo
            pl.BlockSpec((8, cout_p, cin), lambda bi, j: (0, 0, 0)),        # taps W
            pl.BlockSpec((cout_p, 1), lambda bi, j: (0, 0)),                # bias
        ],
        out_specs=pl.BlockSpec((1, cout_p, bm), lambda bi, j: (bi, 0, j)),
        compiler_params=pltpu.CompilerParams(
            dimension_semantics=("parallel", "parallel"),
            vmem_limit_bytes=vmem_limit),
    )(xflat, xflat, w_taps, bias)

    out = out[:, :cout, :m_full].reshape(n, cout, Do, Hp, Wp)
    return out[:, :, :, :Ho, :Wo]


# ----------------------------------------------------------------------------
# Fused 1x1x1 final conv + separable adaptive average pool.
#   Q(ODH, C*DH) = wf[c] * kron(Pd, Ph)[odh, dh]          (conv folded in)
#   acc(ODH, W1) += Q_tile @ X_tile        (MXU, bf16 ops, f32 acc, k-grid)
#   out(ODH, OW)  = acc @ Pw^T + bias      (tiny f32 matmul on the last step)
# ----------------------------------------------------------------------------
def adaptive_pool_matrix(in_size, out_size):
    P = np.zeros((out_size, in_size), np.float32)
    for o in range(out_size):
        s = (o * in_size) // out_size
        e = _cdiv((o + 1) * in_size, out_size)
        P[o, s:e] = 1.0 / (e - s)
    return P


def _final_pool_kernel(x_ref, q_ref, pwt_ref, bf_ref, o_ref, acc_ref):
    k = pl.program_id(1)

    @pl.when(k == 0)
    def _():
        acc_ref[...] = jnp.zeros_like(acc_ref)

    acc_ref[...] += jnp.dot(q_ref[...], x_ref[0],
                            preferred_element_type=jnp.float32)

    @pl.when(k == pl.num_programs(1) - 1)
    def _():
        o_ref[0] = (jnp.dot(acc_ref[...], pwt_ref[...],
                            preferred_element_type=jnp.float32) + bf_ref[...])


def final_conv_pool(x, wf, bf, output_shape, tile_budget, vmem_limit):
    """x: (n, C, D1, H1, W1) bf16 -> (n, OD, OH, OW) f32."""
    n, C, D1, H1, W1 = x.shape
    OD, OH, OW = output_shape
    ODH, DH = OD * OH, D1 * H1
    CDH = C * DH

    # contraction-axis tile: multiple of 128, VMEM-budget aware
    per_row = 2 * 2 * W1 + 2 * 2 * ODH             # X + Q, double-buffered bf16
    cap = max(128, (tile_budget - (2 << 20)) // per_row)
    t_cap = max(128, min(cap, 8192) // 128 * 128)
    t_cdh = min(_round_up(CDH, 128), t_cap)
    if CDH > 256 and t_cdh >= _round_up(CDH, 128):  # single tile -> split so the
        t_cdh = _round_up(_cdiv(CDH, 2), 128)       # k-pipeline has >1 step
    cdh_p = _round_up(CDH, t_cdh)

    Pd = adaptive_pool_matrix(D1, OD)
    Ph = adaptive_pool_matrix(H1, OH)
    Pw = adaptive_pool_matrix(W1, OW)
    Pdh = np.kron(Pd, Ph)                           # (ODH, DH), tiny

    wf_flat = jnp.asarray(wf).reshape(C).astype(jnp.float32)
    q = wf_flat[:, None, None] * jnp.asarray(Pdh)[None, :, :]   # (C, ODH, DH)
    q = jnp.transpose(q, (1, 0, 2)).reshape(ODH, CDH)
    q = jnp.pad(q, ((0, 0), (0, cdh_p - CDH))).astype(jnp.bfloat16)

    xr = x.astype(jnp.bfloat16).reshape(n, CDH, W1)
    if cdh_p > CDH:
        xr = jnp.pad(xr, ((0, 0), (0, cdh_p - CDH), (0, 0)))

    pwt = jnp.asarray(Pw.T, jnp.float32)            # (W1, OW)
    bf_arr = jnp.asarray(bf).reshape(1, 1).astype(jnp.float32)

    nk = cdh_p // t_cdh
    pooled = pl.pallas_call(
        _final_pool_kernel,
        out_shape=jax.ShapeDtypeStruct((n, ODH, OW), jnp.float32),
        grid=(n, nk),
        in_specs=[
            pl.BlockSpec((1, t_cdh, W1), lambda b, k: (b, k, 0)),
            pl.BlockSpec((ODH, t_cdh), lambda b, k: (0, k)),
            pl.BlockSpec((W1, OW), lambda b, k: (0, 0)),
            pl.BlockSpec((1, 1), lambda b, k: (0, 0)),
        ],
        out_specs=pl.BlockSpec((1, ODH, OW), lambda b, k: (b, 0, 0)),
        scratch_shapes=[pltpu.VMEM((ODH, W1), jnp.float32)],
        compiler_params=pltpu.CompilerParams(
            dimension_semantics=("parallel", "arbitrary"),
            vmem_limit_bytes=vmem_limit),
    )(xr, q, pwt, bf_arr)

    return pooled.reshape(n, OD, OH, OW)


# ----------------------------------------------------------------------------
# Full forward pass (channels-first; single bf16 cast at the boundary)
# ----------------------------------------------------------------------------
def temporal_conv_net_forward(x_ncdhw, params, output_shape):
    vmem_limit, tile_budget = _vmem_limits()
    x = x_ncdhw.astype(jnp.bfloat16)                 # cast once (no dead f32 pass)
    for i, (w, b) in enumerate(params["levels"]):
        x = tcn_level(x, w, b, 2 ** i, tile_budget, vmem_limit)  # conv+relu(+drop=id)
    wf, bf = params["final"]                          # (1, C, 1, 1, 1), (1,)
    return final_conv_pool(x, wf, bf, output_shape, tile_budget, vmem_limit)


# ----------------------------------------------------------------------------
# Pure-JAX / numpy reference (correctness check only)
# ----------------------------------------------------------------------------
def reference_forward(x_ncdhw, params, output_shape):
    x = x_ncdhw
    for i, (w, b) in enumerate(params["levels"]):
        d = 2 ** i
        x = lax.conv_general_dilated(
            x, w, window_strides=(1, 1, 1), padding=[(d, d)] * 3,
            rhs_dilation=(d, d, d),
            dimension_numbers=("NCDHW", "OIDHW", "NCDHW"))
        x = jnp.maximum(x + b.reshape(1, -1, 1, 1, 1), 0.0)
    wf, bf = params["final"]
    x = lax.conv_general_dilated(
        x, wf, (1, 1, 1), [(0, 0)] * 3,
        dimension_numbers=("NCDHW", "OIDHW", "NCDHW"))
    x = x + bf.reshape(1, -1, 1, 1, 1)
    x = np.asarray(x)[:, 0]                          # squeeze channel
    n, D1, H1, W1 = x.shape
    OD, OH, OW = output_shape
    out = np.zeros((n, OD, OH, OW), np.float32)
    for od in range(OD):
        ds_, de = od * D1 // OD, _cdiv((od + 1) * D1, OD)
        for oh in range(OH):
            hs, he = oh * H1 // OH, _cdiv((oh + 1) * H1, OH)
            for ow in range(OW):
                ws, we = ow * W1 // OW, _cdiv((ow + 1) * W1, OW)
                out[:, od, oh, ow] = x[:, ds_:de, hs:he, ws:we].mean(
                    axis=(1, 2, 3))
    return out


# ----------------------------------------------------------------------------
# Deterministic parameter init (synthetic; shapes from the module __init__)
# ----------------------------------------------------------------------------
def init_params(key, num_inputs, num_channels):
    params = {"levels": []}
    in_ch = num_inputs
    for out_ch in num_channels:
        key, k1, k2 = jax.random.split(key, 3)
        w = jax.random.normal(k1, (out_ch, in_ch, 2, 2, 2),
                              jnp.float32) / np.sqrt(8 * in_ch)
        b = jax.random.normal(k2, (out_ch,), jnp.float32) * 0.05
        params["levels"].append((w, b))
        in_ch = out_ch
    key, k1, k2 = jax.random.split(key, 3)
    wf = jax.random.normal(k1, (1, in_ch, 1, 1, 1),
                           jnp.float32) / np.sqrt(in_ch)
    bf = jax.random.normal(k2, (1,), jnp.float32) * 0.05
    params["final"] = (wf, bf)
    return params


if __name__ == "__main__":
    output_shape = (13, 2, 11)
    num_inputs = 4
    num_channels = (8, 8)          # two dilated levels (d = 1, 2)

    key = jax.random.PRNGKey(0)
    kx, kp = jax.random.split(key)
    x = jax.random.normal(kx, (2, num_inputs, 8, 8, 8), jnp.float32)  # NCDHW
    params = init_params(kp, num_inputs, num_channels)

    out = temporal_conv_net_forward(x, params, output_shape)
    out = jax.block_until_ready(out)
    assert out.shape == (2,) + output_shape, out.shape

    ref = reference_forward(x, params, output_shape)
    np.testing.assert_allclose(np.asarray(out), ref, rtol=2e-2, atol=2e-2)

    print("KERNEL_OK")
</pallas_src>

<mosaic_0001>
module attributes {stable_mosaic.version = 11 : i64} {
  func.func @kernel(%arg0: i32, %arg1: i32, %arg2: memref<1x4x512xbf16, #tpu.memory_space<vmem>>, %arg3: memref<1x4x128xbf16, #tpu.memory_space<vmem>>, %arg4: memref<8x16x4xbf16, #tpu.memory_space<vmem>>, %arg5: memref<16x1xf32, #tpu.memory_space<vmem>>, %arg6: memref<1x16x512xbf16, #tpu.memory_space<vmem>>) attributes {dimension_semantics = [#tpu.dimension_semantics<parallel>, #tpu.dimension_semantics<parallel>], iteration_bounds = array<i64: 2, 2>, scalar_prefetch = 0 : i64, scratch_operands = 0 : i64, tpu.core_type = #tpu.core_type<tc>, window_params = [{transform_indices = @transform_0, window_bounds = array<i64: 1, 4, 512>}, {transform_indices = @transform_1, window_bounds = array<i64: 1, 4, 128>}, {pipeline_mode = #tpu.pipeline_mode<synchronous>, transform_indices = @transform_2, window_bounds = array<i64: 8, 16, 4>}, {pipeline_mode = #tpu.pipeline_mode<synchronous>, transform_indices = @transform_3, window_bounds = array<i64: 16, 1>}, {transform_indices = @transform_4, window_bounds = array<i64: 1, 16, 512>}]} {
    %c0 = arith.constant 0 : index
    %c0_0 = arith.constant 0 : index
    %c0_1 = arith.constant 0 : index
    %0 = vector.load %arg2[%c0, %c0_0, %c0_1] : memref<1x4x512xbf16, #tpu.memory_space<vmem>>, vector<1x4x512xbf16>
    %1 = vector.shape_cast %0 : vector<1x4x512xbf16> to vector<4x512xbf16>
    %c0_2 = arith.constant 0 : index
    %c0_3 = arith.constant 0 : index
    %c0_4 = arith.constant 0 : index
    %2 = vector.load %arg3[%c0_2, %c0_3, %c0_4] : memref<1x4x128xbf16, #tpu.memory_space<vmem>>, vector<1x4x128xbf16>
    %3 = vector.shape_cast %2 : vector<1x4x128xbf16> to vector<4x128xbf16>
    %4 = tpu.concatenate %1, %3 in 1 : vector<4x512xbf16>, vector<4x128xbf16> -> vector<4x640xbf16>
    %5 = vector.extract_strided_slice %4 {offsets = [0, 0], sizes = [4, 512], strides = [1, 1]} : vector<4x640xbf16> to vector<4x512xbf16>
    %c0_5 = arith.constant 0 : index
    %c0_6 = arith.constant 0 : index
    %c0_7 = arith.constant 0 : index
    %6 = vector.load %arg4[%c0_5, %c0_6, %c0_7] : memref<8x16x4xbf16, #tpu.memory_space<vmem>>, vector<1x16x4xbf16>
    %7 = vector.shape_cast %6 : vector<1x16x4xbf16> to vector<16x4xbf16>
    %cst = arith.constant dense<0.000000e+00> : vector<16x512xf32>
    %8 = tpu.matmul %7, %5, %cst {dimension_numbers = #tpu.dot_dimension_numbers<[1], [0], [0], [1], [0, 0, 1, 1], [], []>} : vector<16x4xbf16>, vector<4x512xbf16>, vector<16x512xf32> -> vector<16x512xf32>
    %9 = vector.extract_strided_slice %4 {offsets = [0, 1], sizes = [4, 512], strides = [1, 1]} : vector<4x640xbf16> to vector<4x512xbf16>
    %c1 = arith.constant 1 : index
    %c0_8 = arith.constant 0 : index
    %c0_9 = arith.constant 0 : index
    %10 = vector.load %arg4[%c1, %c0_8, %c0_9] : memref<8x16x4xbf16, #tpu.memory_space<vmem>>, vector<1x16x4xbf16>
    %11 = vector.shape_cast %10 : vector<1x16x4xbf16> to vector<16x4xbf16>
    %cst_10 = arith.constant dense<0.000000e+00> : vector<16x512xf32>
    %12 = tpu.matmul %11, %9, %cst_10 {dimension_numbers = #tpu.dot_dimension_numbers<[1], [0], [0], [1], [0, 0, 1, 1], [], []>} : vector<16x4xbf16>, vector<4x512xbf16>, vector<16x512xf32> -> vector<16x512xf32>
    %13 = arith.addf %8, %12 : vector<16x512xf32>
    %14 = vector.extract_strided_slice %4 {offsets = [0, 10], sizes = [4, 512], strides = [1, 1]} : vector<4x640xbf16> to vector<4x512xbf16>
    %c2 = arith.constant 2 : index
    %c0_11 = arith.constant 0 : index
    %c0_12 = arith.constant 0 : index
    %15 = vector.load %arg4[%c2, %c0_11, %c0_12] : memref<8x16x4xbf16, #tpu.memory_space<vmem>>, vector<1x16x4xbf16>
    %16 = vector.shape_cast %15 : vector<1x16x4xbf16> to vector<16x4xbf16>
    %cst_13 = arith.constant dense<0.000000e+00> : vector<16x512xf32>
    %17 = tpu.matmul %16, %14, %cst_13 {dimension_numbers = #tpu.dot_dimension_numbers<[1], [0], [0], [1], [0, 0, 1, 1], [], []>} : vector<16x4xbf16>, vector<4x512xbf16>, vector<16x512xf32> -> vector<16x512xf32>
    %18 = arith.addf %13, %17 : vector<16x512xf32>
    %19 = vector.extract_strided_slice %4 {offsets = [0, 11], sizes = [4, 512], strides = [1, 1]} : vector<4x640xbf16> to vector<4x512xbf16>
    %c3 = arith.constant 3 : index
    %c0_14 = arith.constant 0 : index
    %c0_15 = arith.constant 0 : index
    %20 = vector.load %arg4[%c3, %c0_14, %c0_15] : memref<8x16x4xbf16, #tpu.memory_space<vmem>>, vector<1x16x4xbf16>
    %21 = vector.shape_cast %20 : vector<1x16x4xbf16> to vector<16x4xbf16>
    %cst_16 = arith.constant dense<0.000000e+00> : vector<16x512xf32>
    %22 = tpu.matmul %21, %19, %cst_16 {dimension_numbers = #tpu.dot_dimension_numbers<[1], [0], [0], [1], [0, 0, 1, 1], [], []>} : vector<16x4xbf16>, vector<4x512xbf16>, vector<16x512xf32> -> vector<16x512xf32>
    %23 = arith.addf %18, %22 : vector<16x512xf32>
    %24 = vector.extract_strided_slice %4 {offsets = [0, 100], sizes = [4, 512], strides = [1, 1]} : vector<4x640xbf16> to vector<4x512xbf16>
    %c4 = arith.constant 4 : index
    %c0_17 = arith.constant 0 : index
    %c0_18 = arith.constant 0 : index
    %25 = vector.load %arg4[%c4, %c0_17, %c0_18] : memref<8x16x4xbf16, #tpu.memory_space<vmem>>, vector<1x16x4xbf16>
    %26 = vector.shape_cast %25 : vector<1x16x4xbf16> to vector<16x4xbf16>
    %cst_19 = arith.constant dense<0.000000e+00> : vector<16x512xf32>
    %27 = tpu.matmul %26, %24, %cst_19 {dimension_numbers = #tpu.dot_dimension_numbers<[1], [0], [0], [1], [0, 0, 1, 1], [], []>} : vector<16x4xbf16>, vector<4x512xbf16>, vector<16x512xf32> -> vector<16x512xf32>
    %28 = arith.addf %23, %27 : vector<16x512xf32>
    %29 = vector.extract_strided_slice %4 {offsets = [0, 101], sizes = [4, 512], strides = [1, 1]} : vector<4x640xbf16> to vector<4x512xbf16>
    %c5 = arith.constant 5 : index
    %c0_20 = arith.constant 0 : index
    %c0_21 = arith.constant 0 : index
    %30 = vector.load %arg4[%c5, %c0_20, %c0_21] : memref<8x16x4xbf16, #tpu.memory_space<vmem>>, vector<1x16x4xbf16>
    %31 = vector.shape_cast %30 : vector<1x16x4xbf16> to vector<16x4xbf16>
    %cst_22 = arith.constant dense<0.000000e+00> : vector<16x512xf32>
    %32 = tpu.matmul %31, %29, %cst_22 {dimension_numbers = #tpu.dot_dimension_numbers<[1], [0], [0], [1], [0, 0, 1, 1], [], []>} : vector<16x4xbf16>, vector<4x512xbf16>, vector<16x512xf32> -> vector<16x512xf32>
    %33 = arith.addf %28, %32 : vector<16x512xf32>
    %34 = vector.extract_strided_slice %4 {offsets = [0, 110], sizes = [4, 512], strides = [1, 1]} : vector<4x640xbf16> to vector<4x512xbf16>
    %c6 = arith.constant 6 : index
    %c0_23 = arith.constant 0 : index
    %c0_24 = arith.constant 0 : index
    %35 = vector.load %arg4[%c6, %c0_23, %c0_24] : memref<8x16x4xbf16, #tpu.memory_space<vmem>>, vector<1x16x4xbf16>
    %36 = vector.shape_cast %35 : vector<1x16x4xbf16> to vector<16x4xbf16>
    %cst_25 = arith.constant dense<0.000000e+00> : vector<16x512xf32>
    %37 = tpu.matmul %36, %34, %cst_25 {dimension_numbers = #tpu.dot_dimension_numbers<[1], [0], [0], [1], [0, 0, 1, 1], [], []>} : vector<16x4xbf16>, vector<4x512xbf16>, vector<16x512xf32> -> vector<16x512xf32>
    %38 = arith.addf %33, %37 : vector<16x512xf32>
    %39 = vector.extract_strided_slice %4 {offsets = [0, 111], sizes = [4, 512], strides = [1, 1]} : vector<4x640xbf16> to vector<4x512xbf16>
    %c7 = arith.constant 7 : index
    %c0_26 = arith.constant 0 : index
    %c0_27 = arith.constant 0 : index
    %40 = vector.load %arg4[%c7, %c0_26, %c0_27] : memref<8x16x4xbf16, #tpu.memory_space<vmem>>, vector<1x16x4xbf16>
    %41 = vector.shape_cast %40 : vector<1x16x4xbf16> to vector<16x4xbf16>
    %cst_28 = arith.constant dense<0.000000e+00> : vector<16x512xf32>
    %42 = tpu.matmul %41, %39, %cst_28 {dimension_numbers = #tpu.dot_dimension_numbers<[1], [0], [0], [1], [0, 0, 1, 1], [], []>} : vector<16x4xbf16>, vector<4x512xbf16>, vector<16x512xf32> -> vector<16x512xf32>
    %43 = arith.addf %38, %42 : vector<16x512xf32>
    %c0_29 = arith.constant 0 : index
    %c0_30 = arith.constant 0 : index
    %44 = vector.load %arg5[%c0_29, %c0_30] : memref<16x1xf32, #tpu.memory_space<vmem>>, vector<16x1xf32>
    %45 = vector.broadcast %44 : vector<16x1xf32> to vector<16x512xf32>
    %46 = arith.addf %43, %45 : vector<16x512xf32>
    %cst_31 = arith.constant 0.000000e+00 : f32
    %47 = vector.broadcast %cst_31 : f32 to vector<16x512xf32>
    %48 = arith.maximumf %46, %47 : vector<16x512xf32>
    %49 = arith.truncf %48 : vector<16x512xf32> to vector<16x512xbf16>
    %c0_32 = arith.constant 0 : index
    %c0_33 = arith.constant 0 : index
    %c0_34 = arith.constant 0 : index
    %50 = vector.load %arg6[%c0_32, %c0_33, %c0_34] : memref<1x16x512xbf16, #tpu.memory_space<vmem>>, vector<1x16x512xbf16>
    %51 = vector.shape_cast %50 : vector<1x16x512xbf16> to vector<16x512xbf16>
    %52 = vector.shape_cast %49 : vector<16x512xbf16> to vector<1x16x512xbf16>
    tpu.vector_store %arg6[%c0_32, %c0_33, %c0_34], %52 {strides = array<i32>} : memref<1x16x512xbf16, #tpu.memory_space<vmem>>, vector<1x16x512xbf16>,
    return
  }
  func.func @transform_0(%arg0: i32, %arg1: i32) -> (i32, i32, i32) {
    %c0_i32 = arith.constant 0 : i32
    %c0_i32_0 = arith.constant 0 : i32
    return %arg0, %c0_i32, %arg1 : i32, i32, i32
  }
  func.func @transform_1(%arg0: i32, %arg1: i32) -> (i32, i32, i32) {
    %c1_i32 = arith.constant 1 : i32
    %0 = arith.addi %arg1, %c1_i32 : i32
    %c4_i32 = arith.constant 4 : i32
    %1 = arith.muli %0, %c4_i32 : i32
    %c0_i32 = arith.constant 0 : i32
    %c0_i32_0 = arith.constant 0 : i32
    return %arg0, %c0_i32, %1 : i32, i32, i32
  }
  func.func @transform_2(%arg0: i32, %arg1: i32) -> (i32, i32, i32) {
    %c0_i32 = arith.constant 0 : i32
    %c0_i32_0 = arith.constant 0 : i32
    %c0_i32_1 = arith.constant 0 : i32
    %c0_i32_2 = arith.constant 0 : i32
    return %c0_i32, %c0_i32_0, %c0_i32_1 : i32, i32, i32
  }
  func.func @transform_3(%arg0: i32, %arg1: i32) -> (i32, i32) {
    %c0_i32 = arith.constant 0 : i32
    %c0_i32_0 = arith.constant 0 : i32
    %c0_i32_1 = arith.constant 0 : i32
    return %c0_i32, %c0_i32_0 : i32, i32
  }
  func.func @transform_4(%arg0: i32, %arg1: i32) -> (i32, i32, i32) {
    %c0_i32 = arith.constant 0 : i32
    %c0_i32_0 = arith.constant 0 : i32
    return %arg0, %c0_i32, %arg1 : i32, i32, i32
  }
}

</mosaic_0001>

<llo_original>
// kernel: tpu_custom_call.1
$region0: #{tpu_custom_call.1}
  #allocation0 [shape = 'u32[]', space=smem, size = 0x4, offset = 0x4, fixed_abs, tag = 'smem constant byte address 0x4 - core index']
  #allocation1 [shape = 'u32[144,128]{1,0:T(1,128)}', space=vmem, size = 0x12000, scoped, tag = 'internal scratch']
  %s0 = inlined_call_operand.vmem [shape: bf16[2,4,1200], index: 0, kind: input, shape index: {}]
  %s1 = inlined_call_operand.vmem [shape: bf16[2,4,1200], index: 1, kind: input, shape index: {}]
  %s2 = inlined_call_operand.vmem [shape: bf16[8,16,4], index: 2, kind: input, shape index: {}]
  %s3 = inlined_call_operand.vmem [shape: f32[16,1], index: 3, kind: input, shape index: {}]
  %s4 = inlined_call_operand.hbm [shape: bf16[2,16,1024], index: 4, kind: output, shape index: {}]
  %s5 = sld [smem:[#allocation0]]
  $region49: #{tpu_custom_call.1} parent=0
    _
  %s7 = ssub.s32 1, %s5
  %s8 = scalar_select 0, %s7, %s5
  $region1: #{tpu_custom_call.1} parent=0
    #allocation2 [shape = 'u8[32768]{0}', space=vmem, size = 0x8000, scoped, tag = 'output window, operand 0']
    #allocation3 [shape = 's32[2]{0}', space=sflag, size = 0x8, scoped, tag = 'scoped memory for tpu_custom_call.1']
    %9 = vsyncpa [#allocation3], 0
    %s10 = scalar_lea.sflag [#allocation3], 1
    %11 = vsyncpa %s10, 0
    loop: start=0, step=1, limit=6
    $region2: #{tpu_custom_call.1} parent=1 // loop_pre_header
      _
    $region3: #{tpu_custom_call.1} parent=1 // loop_header
      %s13 = sphi 0, %s17
      %p14 = scmp.ge.s32.totalorder %s13, 6
      %s20 = sphi 0, %s32
      %s21 = sphi 0, %s28
      %s22 = sphi 0, %s20
      %s23 = sphi 0, %s21
      %s24 = sphi 0, %s22
      %s25 = sphi 0, %s23
      %s37 = sphi 0, %s39
      %s40 = sphi 0, %s37
      %s41 = sphi 0, %s40
      %s57 = sphi 0, %s41
      %s69 = sphi 0, %s71
      %s72 = sphi 0, %s69
      %s73 = sphi 0, %s72
      %s89 = sphi 0, %s73
      %s93 = sphi 0, %s93
      %s95 = sphi 0, %s93
      %s96 = sphi 0, %s95
      %s110 = sphi 0, %s96
      %s114 = sphi 0, %s114
      %s116 = sphi 0, %s114
      %s117 = sphi 0, %s116
      %s131 = sphi 0, %s117
      %s139 = sphi 0, %s141
      %s142 = sphi 0, %s139
      %s143 = sphi 0, %s142
      %s159 = sphi 0, %s143
    $region4: #{tpu_custom_call.1} parent=1 // loop_header_branch
      %16 = sbr.rel (%p14) target = $region8
    $region5: #{tpu_custom_call.1} parent=1 // loop_body
      %s18 = ssub.s32 %s13, 1
      %s19 = ssub.s32 %s13, 2
      %s26 = sadd.s32 1, %s21
      %p27 = scmp.ge.s32.totalorder %s26, 2
      %s28 = scalar_select %p27, 0, %s26
      %s29 = sadd.s32 1, %s20
      %s30 = scalar_select %p27, %s29, %s20
      %p31 = scmp.ge.s32.totalorder %s30, 2
      %s32 = scalar_select %p31, 0, %s30
      %s33 = ssub.s32 %s20, %s32
      %s34 = ssub.s32 %s21, %s28
      %s35 = sor.u32 %s33, %s34
      %p36 = scmp.eq.s32.totalorder %s35, 0
      %s38 = sadd.s32 %s37, 1
      %s39 = scalar_select %p36, %s37, %s38
      %p42 = pneg %p36
      %p43 = scmp.eq.s32.totalorder %s13, 3
      %p44 = por %p42, %p43
      %p45 = scmp.ne.s32.totalorder %s37, %s40
      %p46 = scmp.eq.s32.totalorder %s13, 0
      %p47 = por %p45, %p46
      %p48 = scmp.ne.s32.totalorder %s37, %s40
      %p49 = scmp.eq.s32.totalorder %s18, 3
      %p50 = por %p48, %p49
      %p51 = scmp.ne.s32.totalorder %s40, %s41
      %p52 = scmp.eq.s32.totalorder %s18, 0
      %p53 = por %p51, %p52
      %p54 = scmp.ne.s32.totalorder %s40, %s41
      %p55 = scmp.eq.s32.totalorder %s19, 3
      %p56 = por %p54, %p55
      %p58 = scmp.ne.s32.totalorder %s41, %s57
      %p59 = scmp.eq.s32.totalorder %s19, 0
      %p60 = por %p58, %p59
      %s61 = sadd.s32 %s21, 1
      %s62 = smul.u32 %s61, 4
      %s63 = sadd.s32 %s28, 1
      %s64 = smul.u32 %s63, 4
      %s65 = ssub.s32 %s20, %s32
      %s66 = ssub.s32 %s62, %s64
      %s67 = sor.u32 %s65, %s66
      %p68 = scmp.eq.s32.totalorder %s67, 0
      %s70 = sadd.s32 %s69, 1
      %s71 = scalar_select %p68, %s69, %s70
      %p74 = pneg %p68
      %p75 = scmp.eq.s32.totalorder %s13, 3
      %p76 = por %p74, %p75
      %p77 = scmp.ne.s32.totalorder %s69, %s72
      %p78 = scmp.eq.s32.totalorder %s13, 0
      %p79 = por %p77, %p78
      %p80 = scmp.ne.s32.totalorder %s69, %s72
      %p81 = scmp.eq.s32.totalorder %s18, 3
      %p82 = por %p80, %p81
      %p83 = scmp.ne.s32.totalorder %s72, %s73
      %p84 = scmp.eq.s32.totalorder %s18, 0
      %p85 = por %p83, %p84
      %p86 = scmp.ne.s32.totalorder %s72, %s73
      %p87 = scmp.eq.s32.totalorder %s19, 3
      %p88 = por %p86, %p87
      %p90 = scmp.ne.s32.totalorder %s73, %s89
      %p91 = scmp.eq.s32.totalorder %s19, 0
      %p92 = por %p90, %p91
      %s94 = sadd.s32 %s93, 1
      %p97 = scmp.eq.s32.totalorder %s13, 3
      %p98 = scmp.ne.s32.totalorder %s93, %s95
      %p99 = scmp.eq.s32.totalorder %s13, 0
      %p100 = por %p98, %p99
      %p101 = scmp.ne.s32.totalorder %s93, %s95
      %p102 = scmp.eq.s32.totalorder %s18, 3
      %p103 = por %p101, %p102
      %p104 = scmp.ne.s32.totalorder %s95, %s96
      %p105 = scmp.eq.s32.totalorder %s18, 0
      %p106 = por %p104, %p105
      %p107 = scmp.ne.s32.totalorder %s95, %s96
      %p108 = scmp.eq.s32.totalorder %s19, 3
      %p109 = por %p107, %p108
      %p111 = scmp.ne.s32.totalorder %s96, %s110
      %p112 = scmp.eq.s32.totalorder %s19, 0
      %p113 = por %p111, %p112
      %s115 = sadd.s32 %s114, 1
      %p118 = scmp.eq.s32.totalorder %s13, 3
      %p119 = scmp.ne.s32.totalorder %s114, %s116
      %p120 = scmp.eq.s32.totalorder %s13, 0
      %p121 = por %p119, %p120
      %p122 = scmp.ne.s32.totalorder %s114, %s116
      %p123 = scmp.eq.s32.totalorder %s18, 3
      %p124 = por %p122, %p123
      %p125 = scmp.ne.s32.totalorder %s116, %s117
      %p126 = scmp.eq.s32.totalorder %s18, 0
      %p127 = por %p125, %p126
      %p128 = scmp.ne.s32.totalorder %s116, %s117
      %p129 = scmp.eq.s32.totalorder %s19, 3
      %p130 = por %p128, %p129
      %p132 = scmp.ne.s32.totalorder %s117, %s131
      %p133 = scmp.eq.s32.totalorder %s19, 0
      %p134 = por %p132, %p133
      %s135 = ssub.s32 %s20, %s32
      %s136 = ssub.s32 %s21, %s28
      %s137 = sor.u32 %s135, %s136
      %p138 = scmp.eq.s32.totalorder %s137, 0
      %s140 = sadd.s32 %s139, 1
      %s141 = scalar_select %p138, %s139, %s140
      %p144 = pneg %p138
      %p145 = scmp.eq.s32.totalorder %s13, 3
      %p146 = por %p144, %p145
      %p147 = scmp.ne.s32.totalorder %s139, %s142
      %p148 = scmp.eq.s32.totalorder %s13, 0
      %p149 = por %p147, %p148
      %p150 = scmp.ne.s32.totalorder %s139, %s142
      %p151 = scmp.eq.s32.totalorder %s18, 3
      %p152 = por %p150, %p151
      %p153 = scmp.ne.s32.totalorder %s142, %s143
      %p154 = scmp.eq.s32.totalorder %s18, 0
      %p155 = por %p153, %p154
      %p156 = scmp.ne.s32.totalorder %s142, %s143
      %p157 = scmp.eq.s32.totalorder %s19, 3
      %p158 = por %p156, %p157
      %p160 = scmp.ne.s32.totalorder %s143, %s159
      %p161 = scmp.eq.s32.totalorder %s19, 0
      %p162 = por %p160, %p161
      %p163 = scmp.le.s32.totalorder 1, %s13
      %p164 = scmp.lt.s32.totalorder %s13, 5
      %p165 = pnand %p163, %p164
      %p166 = pneg %p165
      // Predicated region
      $region9: #{tpu_custom_call.1} parent=5 // pred_check
        _
      $region10: #{tpu_custom_call.1} parent=5 // pred_check_branch
        %168 = sbr.rel (%p165) target = $region12
      $region11: #{tpu_custom_call.1} parent=5 // pred_region
        %s169 = ssub.s32 %s13, 1
        // Predicated region
        $region13: #{tpu_custom_call.1} parent=11 // pred_check
          %p170 = pneg %p106
        $region14: #{tpu_custom_call.1} parent=11 // pred_check_branch
          %172 = sbr.rel (%p170) target = $region16
        $region15: #{tpu_custom_call.1} parent=11 // pred_region
          _
        $region16: #{tpu_custom_call.1} parent=11 // pred_fallthru
          _
        // Predicated region
        $region17: #{tpu_custom_call.1} parent=11 // pred_check
          %p173 = pneg %p127
        $region18: #{tpu_custom_call.1} parent=11 // pred_check_branch
          %175 = sbr.rel (%p173) target = $region20
        $region19: #{tpu_custom_call.1} parent=11 // pred_region
          _
        $region20: #{tpu_custom_call.1} parent=11 // pred_fallthru
          _
      $region12: #{tpu_custom_call.1} parent=5 // pred_fallthru
        _
      %p176 = scmp.lt.s32.totalorder %s13, 4
      // Predicated region
      $region21: #{tpu_custom_call.1} parent=5 // pred_check
        %p177 = pneg %p176
      $region22: #{tpu_custom_call.1} parent=5 // pred_check_branch
        %179 = sbr.rel (%p177) target = $region24
      $region23: #{tpu_custom_call.1} parent=5 // pred_region
        // Predicated region
        $region25: #{tpu_custom_call.1} parent=23 // pred_check
          %p180 = pneg %p47
        $region26: #{tpu_custom_call.1} parent=23 // pred_check_branch
          %182 = sbr.rel (%p180) target = $region28
        $region27: #{tpu_custom_call.1} parent=23 // pred_region
          %s183 = smul.u32 4, %s21
          %s184 = ssub.s32 10, %s183
          %p185 = scmp.lt.s32.totalorder %s184, 4
          %s186 = scalar_select %p185, %s184, 4
          %s187 = smul.u32 32, %s186
          %p188 = scmp.lt.s32.totalorder %s20, 1
          %s189 = scalar_select %p188, %s20, 1
          %p190 = scmp.lt.s32.totalorder %s183, 9
          %s191 = scalar_select %p190, %s183, 9
          %s192 = smul.addr %s189, 10
          %s193 = sadd.s32 %s191, %s192
          %s194 = smul.addr %s193, 2
          %s195 = scalar_lea.vmem %s0, %s194
          %s196 = smul.u32 4, %s21
          %s197 = ssub.s32 10, %s196
          %p198 = scmp.lt.s32.totalorder %s197, 4
          %s199 = scalar_select %p198, %s197, 4
          %s200 = smul.u32 32, %s199
        $region28: #{tpu_custom_call.1} parent=23 // pred_fallthru
          _
        // Predicated region
        $region29: #{tpu_custom_call.1} parent=23 // pred_check
          %p201 = pneg %p79
        $region30: #{tpu_custom_call.1} parent=23 // pred_check_branch
          %203 = sbr.rel (%p201) target = $region32
        $region31: #{tpu_custom_call.1} parent=23 // pred_region
          %s204 = sadd.s32 %s21, 1
          %s205 = smul.u32 %s204, 4
          %p206 = scmp.lt.s32.totalorder %s20, 1
          %s207 = scalar_select %p206, %s20, 1
          %p208 = scmp.lt.s32.totalorder %s205, 9
          %s209 = scalar_select %p208, %s205, 9
          %s210 = smul.addr %s207, 10
          %s211 = sadd.s32 %s209, %s210
          %s212 = smul.addr %s211, 2
          %s213 = scalar_lea.vmem %s1, %s212
          %s214 = sadd.s32 %s21, 1
          %s215 = smul.u32 %s214, 4
        $region32: #{tpu_custom_call.1} parent=23 // pred_fallthru
          _
      $region24: #{tpu_custom_call.1} parent=5 // pred_fallthru
        _
      %p216 = scmp.le.s32.totalorder 1, %s13
      %p217 = scmp.lt.s32.totalorder %s13, 5
      %p218 = pnand %p216, %p217
      %p219 = pneg %p218
      // Predicated region
      $region33: #{tpu_custom_call.1} parent=5 // pred_check
        _
      $region34: #{tpu_custom_call.1} parent=5 // pred_check_branch
        %221 = sbr.rel (%p218) target = $region36
      $region35: #{tpu_custom_call.1} parent=5 // pred_region
        %s222 = ssub.s32 %s13, 1
        %s223 = smul.u32 4, %s23
        %s224 = ssub.s32 10, %s223
        %p225 = scmp.lt.s32.totalorder %s224, 4
        %s226 = scalar_select %p225, %s224, 4
        %s227 = smul.u32 32, %s226
        %p228 = scmp.lt.s32.totalorder %s22, 1
        %s229 = scalar_select %p228, %s22, 1
        %p230 = scmp.lt.s32.totalorder %s223, 9
        %s231 = scalar_select %p230, %s223, 9
        %s232 = smul.addr %s229, 10
        %s233 = sadd.s32 %s231, %s232
        %s234 = smul.addr %s233, 2
        %s235 = scalar_lea.vmem %s0, %s234
        %p236 = pneg %p53
        %p237 = pneg %p50
        %s238 = sadd.s32 %s23, 1
        %s239 = smul.u32 %s238, 4
        %p240 = scmp.lt.s32.totalorder %s22, 1
        %s241 = scalar_select %p240, %s22, 1
        %p242 = scmp.lt.s32.totalorder %s239, 9
        %s243 = scalar_select %p242, %s239, 9
        %s244 = smul.addr %s241, 10
        %s245 = sadd.s32 %s243, %s244
        %s246 = smul.addr %s245, 2
        %s247 = scalar_lea.vmem %s1, %s246
        %p248 = pneg %p85
        %p249 = pneg %p82
        %p250 = pneg %p106
        %p251 = pneg %p103
        %p252 = pneg %p127
        %p253 = pneg %p124
        %p254 = pneg %p155
        %p255 = pneg %p152
        %s256 = sand.u32 %s142, 1
        %s257 = scalar_lea.sflag [#allocation3], %s256
        %s258 = sand.u32 %s142, 1
        %s259 = smul.addr %s258, 32
        %s260 = scalar_lea.vmem [#allocation2], %s259
        %s261 = smul.u32 4, %s23
        %s262 = ssub.s32 10, %s261
        %p263 = scmp.lt.s32.totalorder %s262, 4
        %s264 = scalar_select %p263, %s262, 4
        %s265 = smul.u32 32, %s264
        %p266 = scmp.lt.s32.totalorder %s22, 1
        %s267 = scalar_select %p266, %s22, 1
        %p268 = scmp.lt.s32.totalorder %s261, 9
        %s269 = scalar_select %p268, %s261, 9
        %s270 = smul.addr %s267, 10
        %s271 = sadd.s32 %s269, %s270
        %s272 = smul.addr %s271, 2
        %s273 = scalar_lea.vmem %s0, %s272
        %s274 = smul.u32 4, %s23
        %s275 = ssub.s32 10, %s274
        %p276 = scmp.lt.s32.totalorder %s275, 4
        %s277 = scalar_select %p276, %s275, 4
        %s278 = smul.u32 32, %s277
        %s279 = sadd.s32 %s23, 1
        %s280 = smul.u32 %s279, 4
        %p281 = scmp.lt.s32.totalorder %s22, 1
        %s282 = scalar_select %p281, %s22, 1
        %p283 = scmp.lt.s32.totalorder %s280, 9
        %s284 = scalar_select %p283, %s280, 9
        %s285 = smul.addr %s282, 10
        %s286 = sadd.s32 %s284, %s285
        %s287 = smul.addr %s286, 2
        %s288 = scalar_lea.vmem %s1, %s287
        %s289 = sadd.s32 %s23, 1
        %s290 = smul.u32 %s289, 4
        %s291 = smul.u32 4, %s23
        %v293 = vld [vmem:[%s273] sm:$0xff]
        %v294 = vld [vmem:[%s288] sm:$0x3]
        %v296 = vcombine.high %v293, %v293
        %v298 = vunpack.c.l.s4 1983009808
        %v299 = vunpack.c.0.s8 %v298
        %v300 = vlaneseq
        %v301 = vshrl.u32 %v300, 7
        %v302 = vsub.s32 %v299, %v301
        %v303 = vrot.slane %v293, %v302
        %v305 = vunpack.c.l.s4 1983009808
        %v306 = vunpack.c.0.s8 %v305
        %v307 = vlaneseq
        %v308 = vshrl.u32 %v307, 7
        %v309 = vsub.s32 %v306, %v308
        %v310 = vrot.slane %v296, %v309
        %v311 = vcombine.high %v303, %v303
        %v312 = vcombine.high %v310, %v310
        %v313 = vld [vmem:[%s2] sm:$0xf]
        %v314 = vld [vmem:[%s2 + $0x4] sm:$0xf]
        %s315 = scalar_lea.vmem %s2, 8
        %v316 = vld [vmem:[%s315] sm:$0xf]
        %v317 = vld [vmem:[%s315 + $0x4] sm:$0xf]
        %v320 = vunpack.c.l.b16 %v316
        %v321 = vunpack.c.l.b16 %v317
        %v322 = vpack.c.b16 %v321, %v320
        %324 = vrot.lane.b32.xlu0 %v303, 127
        %v325 = vpop.permute.xlu0 %324
        %326 = vrot.lane.b32.xlu0 %v311, 127
        %v327 = vpop.permute.xlu0 %326
        %328 = vrot.lane.b32.xlu0 %v310, 127
        %v329 = vpop.permute.xlu0 %328
        %330 = vrot.lane.b32.xlu0 %v312, 127
        %v331 = vpop.permute.xlu0 %330
        %332 = vrot.lane.b32.xlu0 %v294, 127
        %v333 = vpop.permute.xlu0 %332
        %vm334 = vcmask 1039360
        %v335 = vsel %vm334, %v325, %v327
        %v336 = vsel %vm334, %v327, %v329
        %v337 = vsel %vm334, %v329, %v331
        %v338 = vsel %vm334, %v331, %v333
        %vm339 = vcmask 31744
        %v341 = vsel %vm339, %v322, 0
        %vm343 = vcmask 1041408
        %v345 = vsel %vm343, %v335, 0
        %v348 = vsel %vm343, %v336, 0
        %v351 = vsel %vm343, %v337, 0
        %v354 = vsel %vm343, %v338, 0
        %356 = vmatprep.subr.bf16.mxu0 %v348
        %357 = vmatpush1.bf16.msra.mxu0 %v345
        %358 = vmatprep.subr.bf16.mxu0 0
        %359 = vmatpush1.bf16.msra.mxu0 0
        %360 = vmatprep.subr.bf16.mxu0 0
        %361 = vmatpush1.bf16.msra.mxu0 0
        %362 = vmatprep.subr.bf16.mxu0 0
        %363 = vmatpush1.bf16.msra.mxu0 0
        %364 = vmatprep.subr.bf16.mxu0 0
        %365 = vmatpush1.bf16.msra.mxu0 0
        %366 = vmatprep.subr.bf16.mxu0 0
        %367 = vmatpush1.bf16.msra.mxu0 0
        %368 = vmatprep.subr.bf16.mxu0 0
        %369 = vmatpush1.bf16.msra.mxu0 0
        %370 = vmatprep.subr.bf16.mxu0 0
        %371 = vmatpush1.bf16.msra.mxu0 0
        %372 = vmatprep.subr.bf16.mxu0 0
        %373 = vmatpush1.bf16.msra.mxu0 0
        %374 = vmatprep.subr.bf16.mxu0 0
        %375 = vmatpush1.bf16.msra.mxu0 0
        %376 = vmatprep.subr.bf16.mxu0 0
        %377 = vmatpush1.bf16.msra.mxu0 0
        %378 = vmatprep.subr.bf16.mxu0 0
        %379 = vmatpush1.bf16.msra.mxu0 0
        %380 = vmatprep.subr.bf16.mxu0 0
        %381 = vmatpush1.bf16.msra.mxu0 0
        %382 = vmatprep.subr.bf16.mxu0 0
        %383 = vmatpush1.bf16.msra.mxu0 0
        %384 = vmatprep.subr.bf16.mxu0 0
        %385 = vmatpush1.bf16.msra.mxu0 0
        %386 = vmatprep.subr.bf16.mxu0 0
        %387 = vmatpush1.bf16.msra.mxu0 0
        %388 = vmatprep.mubr.bf16.mxu0 0
        %389 = vmatmul.mubr.bf16.gmra.mrb[0].mxu0 %v341
        %v390 = vpop.f32.mrb[0].mxu0
        %v391 = vadd.f32 0.0, %v390
        %v392 = vpop.f32.mrb[0].mxu0
        %v393 = vadd.f32 0.0, %v392
        %v394 = vpop.f32.mrb[0].mxu0
        %v395 = vadd.f32 0.0, %v394
        %v396 = vpop.f32.mrb[0].mxu0
        %v397 = vadd.f32 0.0, %v396
        %398 = vdwg.mxu0
        %399 = vmatprep.subr.bf16.mxu0 %v354
        %400 = vmatpush1.bf16.msra.mxu0 %v351
        %401 = vmatprep.subr.bf16.mxu0 0
        %402 = vmatpush1.bf16.msra.mxu0 0
        %403 = vmatprep.subr.bf16.mxu0 0
        %404 = vmatpush1.bf16.msra.mxu0 0
        %405 = vmatprep.subr.bf16.mxu0 0
        %406 = vmatpush1.bf16.msra.mxu0 0
        %407 = vmatprep.subr.bf16.mxu0 0
        %408 = vmatpush1.bf16.msra.mxu0 0
        %409 = vmatprep.subr.bf16.mxu0 0
        %410 = vmatpush1.bf16.msra.mxu0 0
        %411 = vmatprep.subr.bf16.mxu0 0
        %412 = vmatpush1.bf16.msra.mxu0 0
        %413 = vmatprep.subr.bf16.mxu0 0
        %414 = vmatpush1.bf16.msra.mxu0 0
        %415 = vmatprep.subr.bf16.mxu0 0
        %416 = vmatpush1.bf16.msra.mxu0 0
        %417 = vmatprep.subr.bf16.mxu0 0
        %418 = vmatpush1.bf16.msra.mxu0 0
        %419 = vmatprep.subr.bf16.mxu0 0
        %420 = vmatpush1.bf16.msra.mxu0 0
        %421 = vmatprep.subr.bf16.mxu0 0
        %422 = vmatpush1.bf16.msra.mxu0 0
        %423 = vmatprep.subr.bf16.mxu0 0
        %424 = vmatpush1.bf16.msra.mxu0 0
        %425 = vmatprep.subr.bf16.mxu0 0
        %426 = vmatpush1.bf16.msra.mxu0 0
        %427 = vmatprep.subr.bf16.mxu0 0
        %428 = vmatpush1.bf16.msra.mxu0 0
        %429 = vmatprep.subr.bf16.mxu0 0
        %430 = vmatpush1.bf16.msra.mxu0 0
        %431 = vmatprep.mubr.bf16.mxu0 0
        %432 = vmatmul.mubr.bf16.gmra.mrb[0].mxu0 %v341
        %v433 = vpop.f32.mrb[0].mxu0
        %v434 = vadd.f32 0.0, %v433
        %v435 = vpop.f32.mrb[0].mxu0
        %v436 = vadd.f32 0.0, %v435
        %v437 = vpop.f32.mrb[0].mxu0
        %v438 = vadd.f32 0.0, %v437
        %v439 = vpop.f32.mrb[0].mxu0
        %v440 = vadd.f32 0.0, %v439
        %441 = vdwg.mxu0
        %v444 = vunpack.c.l.b16 %v313
        %v445 = vunpack.c.l.b16 %v314
        %v446 = vpack.c.b16 %v445, %v444
        %v448 = vsel %vm339, %v446, 0
        %v451 = vsel %vm343, %v303, 0
        %v454 = vsel %vm343, %v311, 0
        %v457 = vsel %vm343, %v310, 0
        %v460 = vsel %vm343, %v312, 0
        %462 = vmatprep.subr.bf16.mxu0 %v454
        %463 = vmatpush1.bf16.msra.mxu0 %v451
        %464 = vmatprep.subr.bf16.mxu0 0
        %465 = vmatpush1.bf16.msra.mxu0 0
        %466 = vmatprep.subr.bf16.mxu0 0
        %467 = vmatpush1.bf16.msra.mxu0 0
        %468 = vmatprep.subr.bf16.mxu0 0
        %469 = vmatpush1.bf16.msra.mxu0 0
        %470 = vmatprep.subr.bf16.mxu0 0
        %471 = vmatpush1.bf16.msra.mxu0 0
        %472 = vmatprep.subr.bf16.mxu0 0
        %473 = vmatpush1.bf16.msra.mxu0 0
        %474 = vmatprep.subr.bf16.mxu0 0
        %475 = vmatpush1.bf16.msra.mxu0 0
        %476 = vmatprep.subr.bf16.mxu0 0
        %477 = vmatpush1.bf16.msra.mxu0 0
        %478 = vmatprep.subr.bf16.mxu0 0
        %479 = vmatpush1.bf16.msra.mxu0 0
        %480 = vmatprep.subr.bf16.mxu0 0
        %481 = vmatpush1.bf16.msra.mxu0 0
        %482 = vmatprep.subr.bf16.mxu0 0
        %483 = vmatpush1.bf16.msra.mxu0 0
        %484 = vmatprep.subr.bf16.mxu0 0
        %485 = vmatpush1.bf16.msra.mxu0 0
        %486 = vmatprep.subr.bf16.mxu0 0
        %487 = vmatpush1.bf16.msra.mxu0 0
        %488 = vmatprep.subr.bf16.mxu0 0
        %489 = vmatpush1.bf16.msra.mxu0 0
        %490 = vmatprep.subr.bf16.mxu0 0
        %491 = vmatpush1.bf16.msra.mxu0 0
        %492 = vmatprep.subr.bf16.mxu0 0
        %493 = vmatpush1.bf16.msra.mxu0 0
        %494 = vmatprep.mubr.bf16.mxu0 0
        %495 = vmatmul.mubr.bf16.gmra.mrb[0].mxu0 %v448
        %v496 = vpop.f32.mrb[0].mxu0
        %v497 = vadd.f32 %v391, %v496
        %v498 = vpop.f32.mrb[0].mxu0
        %v499 = vadd.f32 %v393, %v498
        %v500 = vpop.f32.mrb[0].mxu0
        %v501 = vadd.f32 %v395, %v500
        %v502 = vpop.f32.mrb[0].mxu0
        %v503 = vadd.f32 %v397, %v502
        %504 = vdwg.mxu0
        %505 = vmatprep.subr.bf16.mxu0 %v460
        %506 = vmatpush1.bf16.msra.mxu0 %v457
        %507 = vmatprep.subr.bf16.mxu0 0
        %508 = vmatpush1.bf16.msra.mxu0 0
        %509 = vmatprep.subr.bf16.mxu0 0
        %510 = vmatpush1.bf16.msra.mxu0 0
        %511 = vmatprep.subr.bf16.mxu0 0
        %512 = vmatpush1.bf16.msra.mxu0 0
        %513 = vmatprep.subr.bf16.mxu0 0
        %514 = vmatpush1.bf16.msra.mxu0 0
        %515 = vmatprep.subr.bf16.mxu0 0
        %516 = vmatpush1.bf16.msra.mxu0 0
        %517 = vmatprep.subr.bf16.mxu0 0
        %518 = vmatpush1.bf16.msra.mxu0 0
        %519 = vmatprep.subr.bf16.mxu0 0
        %520 = vmatpush1.bf16.msra.mxu0 0
        %521 = vmatprep.subr.bf16.mxu0 0
        %522 = vmatpush1.bf16.msra.mxu0 0
        %523 = vmatprep.subr.bf16.mxu0 0
        %524 = vmatpush1.bf16.msra.mxu0 0
        %525 = vmatprep.subr.bf16.mxu0 0
        %526 = vmatpush1.bf16.msra.mxu0 0
        %527 = vmatprep.subr.bf16.mxu0 0
        %528 = vmatpush1.bf16.msra.mxu0 0
        %529 = vmatprep.subr.bf16.mxu0 0
        %530 = vmatpush1.bf16.msra.mxu0 0
        %531 = vmatprep.subr.bf16.mxu0 0
        %532 = vmatpush1.bf16.msra.mxu0 0
        %533 = vmatprep.subr.bf16.mxu0 0
        %534 = vmatpush1.bf16.msra.mxu0 0
        %535 = vmatprep.subr.bf16.mxu0 0
        %536 = vmatpush1.bf16.msra.mxu0 0
        %537 = vmatprep.mubr.bf16.mxu0 0
        %538 = vmatmul.mubr.bf16.gmra.mrb[0].mxu0 %v448
        %v539 = vpop.f32.mrb[0].mxu0
        %v540 = vadd.f32 %v434, %v539
        %v541 = vpop.f32.mrb[0].mxu0
        %v542 = vadd.f32 %v436, %v541
        %v543 = vpop.f32.mrb[0].mxu0
        %v544 = vadd.f32 %v438, %v543
        %v545 = vpop.f32.mrb[0].mxu0
        %v546 = vadd.f32 %v440, %v545
        %547 = vdwg.mxu0
        %s548 = scalar_lea.vmem %s2, 16
        %v549 = vld [vmem:[%s548] sm:$0xf]
        %v550 = vld [vmem:[%s548 + $0x4] sm:$0xf]
        %v553 = vunpack.c.l.b16 %v549
        %v554 = vunpack.c.l.b16 %v550
        %v555 = vpack.c.b16 %v554, %v553
        %556 = vrot.lane.b32.xlu0 %v303, 118
        %v557 = vpop.permute.xlu0 %556
        %558 = vrot.lane.b32.xlu0 %v311, 118
        %v559 = vpop.permute.xlu0 %558
        %560 = vrot.lane.b32.xlu0 %v310, 118
        %v561 = vpop.permute.xlu0 %560
        %562 = vrot.lane.b32.xlu0 %v312, 118
        %v563 = vpop.permute.xlu0 %562
        %564 = vrot.lane.b32.xlu0 %v294, 118
        %v565 = vpop.permute.xlu0 %564
        %vm566 = vcmask 965632
        %v567 = vsel %vm566, %v557, %v559
        %v568 = vsel %vm566, %v559, %v561
        %v569 = vsel %vm566, %v561, %v563
        %v570 = vsel %vm566, %v563, %v565
        %v572 = vsel %vm339, %v555, 0
        %v575 = vsel %vm343, %v567, 0
        %v578 = vsel %vm343, %v568, 0
        %v581 = vsel %vm343, %v569, 0
        %v584 = vsel %vm343, %v570, 0
        %586 = vmatprep.subr.bf16.mxu0 %v578
        %587 = vmatpush1.bf16.msra.mxu0 %v575
        %588 = vmatprep.subr.bf16.mxu0 0
        %589 = vmatpush1.bf16.msra.mxu0 0
        %590 = vmatprep.subr.bf16.mxu0 0
        %591 = vmatpush1.bf16.msra.mxu0 0
        %592 = vmatprep.subr.bf16.mxu0 0
        %593 = vmatpush1.bf16.msra.mxu0 0
        %594 = vmatprep.subr.bf16.mxu0 0
        %595 = vmatpush1.bf16.msra.mxu0 0
        %596 = vmatprep.subr.bf16.mxu0 0
        %597 = vmatpush1.bf16.msra.mxu0 0
        %598 = vmatprep.subr.bf16.mxu0 0
        %599 = vmatpush1.bf16.msra.mxu0 0
        %600 = vmatprep.subr.bf16.mxu0 0
        %601 = vmatpush1.bf16.msra.mxu0 0
        %602 = vmatprep.subr.bf16.mxu0 0
        %603 = vmatpush1.bf16.msra.mxu0 0
        %604 = vmatprep.subr.bf16.mxu0 0
        %605 = vmatpush1.bf16.msra.mxu0 0
        %606 = vmatprep.subr.bf16.mxu0 0
        %607 = vmatpush1.bf16.msra.mxu0 0
        %608 = vmatprep.subr.bf16.mxu0 0
        %609 = vmatpush1.bf16.msra.mxu0 0
        %610 = vmatprep.subr.bf16.mxu0 0
        %611 = vmatpush1.bf16.msra.mxu0 0
        %612 = vmatprep.subr.bf16.mxu0 0
        %613 = vmatpush1.bf16.msra.mxu0 0
        %614 = vmatprep.subr.bf16.mxu0 0
        %615 = vmatpush1.bf16.msra.mxu0 0
        %616 = vmatprep.subr.bf16.mxu0 0
        %617 = vmatpush1.bf16.msra.mxu0 0
        %618 = vmatprep.mubr.bf16.mxu0 0
        %619 = vmatmul.mubr.bf16.gmra.mrb[0].mxu0 %v572
        %v620 = vpop.f32.mrb[0].mxu0
        %v621 = vadd.f32 0.0, %v620
        %v622 = vpop.f32.mrb[0].mxu0
        %v623 = vadd.f32 0.0, %v622
        %v624 = vpop.f32.mrb[0].mxu0
        %v625 = vadd.f32 0.0, %v624
        %v626 = vpop.f32.mrb[0].mxu0
        %v627 = vadd.f32 0.0, %v626
        %628 = vdwg.mxu0
        %629 = vmatprep.subr.bf16.mxu0 %v584
        %630 = vmatpush1.bf16.msra.mxu0 %v581
        %631 = vmatprep.subr.bf16.mxu0 0
        %632 = vmatpush1.bf16.msra.mxu0 0
        %633 = vmatprep.subr.bf16.mxu0 0
        %634 = vmatpush1.bf16.msra.mxu0 0
        %635 = vmatprep.subr.bf16.mxu0 0
        %636 = vmatpush1.bf16.msra.mxu0 0
        %637 = vmatprep.subr.bf16.mxu0 0
        %638 = vmatpush1.bf16.msra.mxu0 0
        %639 = vmatprep.subr.bf16.mxu0 0
        %640 = vmatpush1.bf16.msra.mxu0 0
        %641 = vmatprep.subr.bf16.mxu0 0
        %642 = vmatpush1.bf16.msra.mxu0 0
        %643 = vmatprep.subr.bf16.mxu0 0
        %644 = vmatpush1.bf16.msra.mxu0 0
        %645 = vmatprep.subr.bf16.mxu0 0
        %646 = vmatpush1.bf16.msra.mxu0 0
        %647 = vmatprep.subr.bf16.mxu0 0
        %648 = vmatpush1.bf16.msra.mxu0 0
        %649 = vmatprep.subr.bf16.mxu0 0
        %650 = vmatpush1.bf16.msra.mxu0 0
        %651 = vmatprep.subr.bf16.mxu0 0
        %652 = vmatpush1.bf16.msra.mxu0 0
        %653 = vmatprep.subr.bf16.mxu0 0
        %654 = vmatpush1.bf16.msra.mxu0 0
        %655 = vmatprep.subr.bf16.mxu0 0
        %656 = vmatpush1.bf16.msra.mxu0 0
        %657 = vmatprep.subr.bf16.mxu0 0
        %658 = vmatpush1.bf16.msra.mxu0 0
        %659 = vmatprep.subr.bf16.mxu0 0
        %660 = vmatpush1.bf16.msra.mxu0 0
        %661 = vmatprep.mubr.bf16.mxu0 0
        %662 = vmatmul.mubr.bf16.gmra.mrb[0].mxu0 %v572
        %v663 = vpop.f32.mrb[0].mxu0
        %v664 = vadd.f32 0.0, %v663
        %v665 = vpop.f32.mrb[0].mxu0
        %v666 = vadd.f32 0.0, %v665
        %v667 = vpop.f32.mrb[0].mxu0
        %v668 = vadd.f32 0.0, %v667
        %v669 = vpop.f32.mrb[0].mxu0
        %v670 = vadd.f32 0.0, %v669
        %671 = vdwg.mxu0
        %v672 = vadd.f32 %v497, %v621
        %v673 = vadd.f32 %v499, %v623
        %v674 = vadd.f32 %v540, %v664
        %v675 = vadd.f32 %v542, %v666
        %v676 = vadd.f32 %v501, %v625
        %v677 = vadd.f32 %v503, %v627
        %v678 = vadd.f32 %v544, %v668
        %v679 = vadd.f32 %v546, %v670
        %s680 = scalar_lea.vmem %s2, 24
        %v681 = vld [vmem:[%s680] sm:$0xf]
        %v682 = vld [vmem:[%s680 + $0x4] sm:$0xf]
        %v685 = vunpack.c.l.b16 %v681
        %v686 = vunpack.c.l.b16 %v682
        %v687 = vpack.c.b16 %v686, %v685
        %688 = vrot.lane.b32.xlu0 %v303, 117
        %v689 = vpop.permute.xlu0 %688
        %690 = vrot.lane.b32.xlu0 %v311, 117
        %v691 = vpop.permute.xlu0 %690
        %692 = vrot.lane.b32.xlu0 %v310, 117
        %v693 = vpop.permute.xlu0 %692
        %694 = vrot.lane.b32.xlu0 %v312, 117
        %v695 = vpop.permute.xlu0 %694
        %696 = vrot.lane.b32.xlu0 %v294, 117
        %v697 = vpop.permute.xlu0 %696
        %vm698 = vcmask 957440
        %v699 = vsel %vm698, %v689, %v691
        %v700 = vsel %vm698, %v691, %v693
        %v701 = vsel %vm698, %v693, %v695
        %v702 = vsel %vm698, %v695, %v697
        %v704 = vsel %vm339, %v687, 0
        %v707 = vsel %vm343, %v699, 0
        %v710 = vsel %vm343, %v700, 0
        %v713 = vsel %vm343, %v701, 0
        %v716 = vsel %vm343, %v702, 0
        %718 = vmatprep.subr.bf16.mxu0 %v710
        %719 = vmatpush1.bf16.msra.mxu0 %v707
        %720 = vmatprep.subr.bf16.mxu0 0
        %721 = vmatpush1.bf16.msra.mxu0 0
        %722 = vmatprep.subr.bf16.mxu0 0
        %723 = vmatpush1.bf16.msra.mxu0 0
        %724 = vmatprep.subr.bf16.mxu0 0
        %725 = vmatpush1.bf16.msra.mxu0 0
        %726 = vmatprep.subr.bf16.mxu0 0
        %727 = vmatpush1.bf16.msra.mxu0 0
        %728 = vmatprep.subr.bf16.mxu0 0
        %729 = vmatpush1.bf16.msra.mxu0 0
        %730 = vmatprep.subr.bf16.mxu0 0
        %731 = vmatpush1.bf16.msra.mxu0 0
        %732 = vmatprep.subr.bf16.mxu0 0
        %733 = vmatpush1.bf16.msra.mxu0 0
        %734 = vmatprep.subr.bf16.mxu0 0
        %735 = vmatpush1.bf16.msra.mxu0 0
        %736 = vmatprep.subr.bf16.mxu0 0
        %737 = vmatpush1.bf16.msra.mxu0 0
        %738 = vmatprep.subr.bf16.mxu0 0
        %739 = vmatpush1.bf16.msra.mxu0 0
        %740 = vmatprep.subr.bf16.mxu0 0
        %741 = vmatpush1.bf16.msra.mxu0 0
        %742 = vmatprep.subr.bf16.mxu0 0
        %743 = vmatpush1.bf16.msra.mxu0 0
        %744 = vmatprep.subr.bf16.mxu0 0
        %745 = vmatpush1.bf16.msra.mxu0 0
        %746 = vmatprep.subr.bf16.mxu0 0
        %747 = vmatpush1.bf16.msra.mxu0 0
        %748 = vmatprep.subr.bf16.mxu0 0
        %749 = vmatpush1.bf16.msra.mxu0 0
        %750 = vmatprep.mubr.bf16.mxu0 0
        %751 = vmatmul.mubr.bf16.gmra.mrb[0].mxu0 %v704
        %v752 = vpop.f32.mrb[0].mxu0
        %v753 = vadd.f32 0.0, %v752
        %v754 = vpop.f32.mrb[0].mxu0
        %v755 = vadd.f32 0.0, %v754
        %v756 = vpop.f32.mrb[0].mxu0
        %v757 = vadd.f32 0.0, %v756
        %v758 = vpop.f32.mrb[0].mxu0
        %v759 = vadd.f32 0.0, %v758
        %760 = vdwg.mxu0
        %761 = vmatprep.subr.bf16.mxu0 %v716
        %762 = vmatpush1.bf16.msra.mxu0 %v713
        %763 = vmatprep.subr.bf16.mxu0 0
        %764 = vmatpush1.bf16.msra.mxu0 0
        %765 = vmatprep.subr.bf16.mxu0 0
        %766 = vmatpush1.bf16.msra.mxu0 0
        %767 = vmatprep.subr.bf16.mxu0 0
        %768 = vmatpush1.bf16.msra.mxu0 0
        %769 = vmatprep.subr.bf16.mxu0 0
        %770 = vmatpush1.bf16.msra.mxu0 0
        %771 = vmatprep.subr.bf16.mxu0 0
        %772 = vmatpush1.bf16.msra.mxu0 0
        %773 = vmatprep.subr.bf16.mxu0 0
        %774 = vmatpush1.bf16.msra.mxu0 0
        %775 = vmatprep.subr.bf16.mxu0 0
        %776 = vmatpush1.bf16.msra.mxu0 0
        %777 = vmatprep.subr.bf16.mxu0 0
        %778 = vmatpush1.bf16.msra.mxu0 0
        %779 = vmatprep.subr.bf16.mxu0 0
        %780 = vmatpush1.bf16.msra.mxu0 0
        %781 = vmatprep.subr.bf16.mxu0 0
        %782 = vmatpush1.bf16.msra.mxu0 0
        %783 = vmatprep.subr.bf16.mxu0 0
        %784 = vmatpush1.bf16.msra.mxu0 0
        %785 = vmatprep.subr.bf16.mxu0 0
        %786 = vmatpush1.bf16.msra.mxu0 0
        %787 = vmatprep.subr.bf16.mxu0 0
        %788 = vmatpush1.bf16.msra.mxu0 0
        %789 = vmatprep.subr.bf16.mxu0 0
        %790 = vmatpush1.bf16.msra.mxu0 0
        %791 = vmatprep.subr.bf16.mxu0 0
        %792 = vmatpush1.bf16.msra.mxu0 0
        %793 = vmatprep.mubr.bf16.mxu0 0
        %794 = vmatmul.mubr.bf16.gmra.mrb[0].mxu0 %v704
        %v795 = vpop.f32.mrb[0].mxu0
        %v796 = vadd.f32 0.0, %v795
        %v797 = vpop.f32.mrb[0].mxu0
        %v798 = vadd.f32 0.0, %v797
        %v799 = vpop.f32.mrb[0].mxu0
        %v800 = vadd.f32 0.0, %v799
        %v801 = vpop.f32.mrb[0].mxu0
        %v802 = vadd.f32 0.0, %v801
        %803 = vdwg.mxu0
        %v804 = vadd.f32 %v672, %v753
        %v805 = vadd.f32 %v673, %v755
        %v806 = vadd.f32 %v674, %v796
        %v807 = vadd.f32 %v675, %v798
        %v808 = vadd.f32 %v676, %v757
        %v809 = vadd.f32 %v677, %v759
        %v810 = vadd.f32 %v678, %v800
        %v811 = vadd.f32 %v679, %v802
        %s812 = scalar_lea.vmem %s2, 32
        %v813 = vld [vmem:[%s812] sm:$0xf]
        %v814 = vld [vmem:[%s812 + $0x4] sm:$0xf]
        %v817 = vunpack.c.l.b16 %v813
        %v818 = vunpack.c.l.b16 %v814
        %v819 = vpack.c.b16 %v818, %v817
        %820 = vrot.lane.b32.xlu0 %v303, 28
        %v821 = vpop.permute.xlu0 %820
        %822 = vrot.lane.b32.xlu0 %v311, 28
        %v823 = vpop.permute.xlu0 %822
        %824 = vrot.lane.b32.xlu0 %v310, 28
        %v825 = vpop.permute.xlu0 %824
        %826 = vrot.lane.b32.xlu0 %v312, 28
        %v827 = vpop.permute.xlu0 %826
        %828 = vrot.lane.b32.xlu0 %v294, 28
        %v829 = vpop.permute.xlu0 %828
        %vm830 = vcmask 228352
        %v831 = vsel %vm830, %v821, %v823
        %v832 = vsel %vm830, %v823, %v825
        %v833 = vsel %vm830, %v825, %v827
        %v834 = vsel %vm830, %v827, %v829
        %v836 = vsel %vm339, %v819, 0
        %v839 = vsel %vm343, %v831, 0
        %v842 = vsel %vm343, %v832, 0
        %v845 = vsel %vm343, %v833, 0
        %v848 = vsel %vm343, %v834, 0
        %850 = vmatprep.subr.bf16.mxu0 %v842
        %851 = vmatpush1.bf16.msra.mxu0 %v839
        %852 = vmatprep.subr.bf16.mxu0 0
        %853 = vmatpush1.bf16.msra.mxu0 0
        %854 = vmatprep.subr.bf16.mxu0 0
        %855 = vmatpush1.bf16.msra.mxu0 0
        %856 = vmatprep.subr.bf16.mxu0 0
        %857 = vmatpush1.bf16.msra.mxu0 0
        %858 = vmatprep.subr.bf16.mxu0 0
        %859 = vmatpush1.bf16.msra.mxu0 0
        %860 = vmatprep.subr.bf16.mxu0 0
        %861 = vmatpush1.bf16.msra.mxu0 0
        %862 = vmatprep.subr.bf16.mxu0 0
        %863 = vmatpush1.bf16.msra.mxu0 0
        %864 = vmatprep.subr.bf16.mxu0 0
        %865 = vmatpush1.bf16.msra.mxu0 0
        %866 = vmatprep.subr.bf16.mxu0 0
        %867 = vmatpush1.bf16.msra.mxu0 0
        %868 = vmatprep.subr.bf16.mxu0 0
        %869 = vmatpush1.bf16.msra.mxu0 0
        %870 = vmatprep.subr.bf16.mxu0 0
        %871 = vmatpush1.bf16.msra.mxu0 0
        %872 = vmatprep.subr.bf16.mxu0 0
        %873 = vmatpush1.bf16.msra.mxu0 0
        %874 = vmatprep.subr.bf16.mxu0 0
        %875 = vmatpush1.bf16.msra.mxu0 0
        %876 = vmatprep.subr.bf16.mxu0 0
        %877 = vmatpush1.bf16.msra.mxu0 0
        %878 = vmatprep.subr.bf16.mxu0 0
        %879 = vmatpush1.bf16.msra.mxu0 0
        %880 = vmatprep.subr.bf16.mxu0 0
        %881 = vmatpush1.bf16.msra.mxu0 0
        %882 = vmatprep.mubr.bf16.mxu0 0
        %883 = vmatmul.mubr.bf16.gmra.mrb[0].mxu0 %v836
        %v884 = vpop.f32.mrb[0].mxu0
        %v885 = vadd.f32 0.0, %v884
        %v886 = vpop.f32.mrb[0].mxu0
        %v887 = vadd.f32 0.0, %v886
        %v888 = vpop.f32.mrb[0].mxu0
        %v889 = vadd.f32 0.0, %v888
        %v890 = vpop.f32.mrb[0].mxu0
        %v891 = vadd.f32 0.0, %v890
        %892 = vdwg.mxu0
        %893 = vmatprep.subr.bf16.mxu0 %v848
        %894 = vmatpush1.bf16.msra.mxu0 %v845
        %895 = vmatprep.subr.bf16.mxu0 0
        %896 = vmatpush1.bf16.msra.mxu0 0
        %897 = vmatprep.subr.bf16.mxu0 0
        %898 = vmatpush1.bf16.msra.mxu0 0
        %899 = vmatprep.subr.bf16.mxu0 0
        %900 = vmatpush1.bf16.msra.mxu0 0
        %901 = vmatprep.subr.bf16.mxu0 0
        %902 = vmatpush1.bf16.msra.mxu0 0
        %903 = vmatprep.subr.bf16.mxu0 0
        %904 = vmatpush1.bf16.msra.mxu0 0
        %905 = vmatprep.subr.bf16.mxu0 0
        %906 = vmatpush1.bf16.msra.mxu0 0
        %907 = vmatprep.subr.bf16.mxu0 0
        %908 = vmatpush1.bf16.msra.mxu0 0
        %909 = vmatprep.subr.bf16.mxu0 0
        %910 = vmatpush1.bf16.msra.mxu0 0
        %911 = vmatprep.subr.bf16.mxu0 0
        %912 = vmatpush1.bf16.msra.mxu0 0
        %913 = vmatprep.subr.bf16.mxu0 0
        %914 = vmatpush1.bf16.msra.mxu0 0
        %915 = vmatprep.subr.bf16.mxu0 0
        %916 = vmatpush1.bf16.msra.mxu0 0
        %917 = vmatprep.subr.bf16.mxu0 0
        %918 = vmatpush1.bf16.msra.mxu0 0
        %919 = vmatprep.subr.bf16.mxu0 0
        %920 = vmatpush1.bf16.msra.mxu0 0
        %921 = vmatprep.subr.bf16.mxu0 0
        %922 = vmatpush1.bf16.msra.mxu0 0
        %923 = vmatprep.subr.bf16.mxu0 0
        %924 = vmatpush1.bf16.msra.mxu0 0
        %925 = vmatprep.mubr.bf16.mxu0 0
        %926 = vmatmul.mubr.bf16.gmra.mrb[0].mxu0 %v836
        %v927 = vpop.f32.mrb[0].mxu0
        %v928 = vadd.f32 0.0, %v927
        %v929 = vpop.f32.mrb[0].mxu0
        %v930 = vadd.f32 0.0, %v929
        %v931 = vpop.f32.mrb[0].mxu0
        %v932 = vadd.f32 0.0, %v931
        %v933 = vpop.f32.mrb[0].mxu0
        %v934 = vadd.f32 0.0, %v933
        %935 = vdwg.mxu0
        %v936 = vadd.f32 %v804, %v885
        %v937 = vadd.f32 %v805, %v887
        %v938 = vadd.f32 %v806, %v928
        %v939 = vadd.f32 %v807, %v930
        %v940 = vadd.f32 %v808, %v889
        %v941 = vadd.f32 %v809, %v891
        %v942 = vadd.f32 %v810, %v932
        %v943 = vadd.f32 %v811, %v934
        %s944 = scalar_lea.vmem %s2, 40
        %v945 = vld [vmem:[%s944] sm:$0xf]
        %v946 = vld [vmem:[%s944 + $0x4] sm:$0xf]
        %v949 = vunpack.c.l.b16 %v945
        %v950 = vunpack.c.l.b16 %v946
        %v951 = vpack.c.b16 %v950, %v949
        %952 = vrot.lane.b32.xlu0 %v303, 27
        %v953 = vpop.permute.xlu0 %952
        %954 = vrot.lane.b32.xlu0 %v311, 27
        %v955 = vpop.permute.xlu0 %954
        %956 = vrot.lane.b32.xlu0 %v310, 27
        %v957 = vpop.permute.xlu0 %956
        %958 = vrot.lane.b32.xlu0 %v312, 27
        %v959 = vpop.permute.xlu0 %958
        %960 = vrot.lane.b32.xlu0 %v294, 27
        %v961 = vpop.permute.xlu0 %960
        %vm962 = vcmask 220160
        %v963 = vsel %vm962, %v953, %v955
        %v964 = vsel %vm962, %v955, %v957
        %v965 = vsel %vm962, %v957, %v959
        %v966 = vsel %vm962, %v959, %v961
        %v968 = vsel %vm339, %v951, 0
        %v971 = vsel %vm343, %v963, 0
        %v974 = vsel %vm343, %v964, 0
        %v977 = vsel %vm343, %v965, 0
        %v980 = vsel %vm343, %v966, 0
        %982 = vmatprep.subr.bf16.mxu0 %v974
        %983 = vmatpush1.bf16.msra.mxu0 %v971
        %984 = vmatprep.subr.bf16.mxu0 0
        %985 = vmatpush1.bf16.msra.mxu0 0
        %986 = vmatprep.subr.bf16.mxu0 0
        %987 = vmatpush1.bf16.msra.mxu0 0
        %988 = vmatprep.subr.bf16.mxu0 0
        %989 = vmatpush1.bf16.msra.mxu0 0
        %990 = vmatprep.subr.bf16.mxu0 0
        %991 = vmatpush1.bf16.msra.mxu0 0
        %992 = vmatprep.subr.bf16.mxu0 0
        %993 = vmatpush1.bf16.msra.mxu0 0
        %994 = vmatprep.subr.bf16.mxu0 0
        %995 = vmatpush1.bf16.msra.mxu0 0
        %996 = vmatprep.subr.bf16.mxu0 0
        %997 = vmatpush1.bf16.msra.mxu0 0
        %998 = vmatprep.subr.bf16.mxu0 0
        %999 = vmatpush1.bf16.msra.mxu0 0
        %1000 = vmatprep.subr.bf16.mxu0 0
        %1001 = vmatpush1.bf16.msra.mxu0 0
        %1002 = vmatprep.subr.bf16.mxu0 0
        %1003 = vmatpush1.bf16.msra.mxu0 0
        %1004 = vmatprep.subr.bf16.mxu0 0
        %1005 = vmatpush1.bf16.msra.mxu0 0
        %1006 = vmatprep.subr.bf16.mxu0 0
        %1007 = vmatpush1.bf16.msra.mxu0 0
        %1008 = vmatprep.subr.bf16.mxu0 0
        %1009 = vmatpush1.bf16.msra.mxu0 0
        %1010 = vmatprep.subr.bf16.mxu0 0
        %1011 = vmatpush1.bf16.msra.mxu0 0
        %1012 = vmatprep.subr.bf16.mxu0 0
        %1013 = vmatpush1.bf16.msra.mxu0 0
        %1014 = vmatprep.mubr.bf16.mxu0 0
        %1015 = vmatmul.mubr.bf16.gmra.mrb[0].mxu0 %v968
        %v1016 = vpop.f32.mrb[0].mxu0
        %v1017 = vadd.f32 0.0, %v1016
        %v1018 = vpop.f32.mrb[0].mxu0
        %v1019 = vadd.f32 0.0, %v1018
        %v1020 = vpop.f32.mrb[0].mxu0
        %v1021 = vadd.f32 0.0, %v1020
        %v1022 = vpop.f32.mrb[0].mxu0
        %v1023 = vadd.f32 0.0, %v1022
        %1024 = vdwg.mxu0
        %1025 = vmatprep.subr.bf16.mxu0 %v980
        %1026 = vmatpush1.bf16.msra.mxu0 %v977
        %1027 = vmatprep.subr.bf16.mxu0 0
        %1028 = vmatpush1.bf16.msra.mxu0 0
        %1029 = vmatprep.subr.bf16.mxu0 0
        %1030 = vmatpush1.bf16.msra.mxu0 0
        %1031 = vmatprep.subr.bf16.mxu0 0
        %1032 = vmatpush1.bf16.msra.mxu0 0
        %1033 = vmatprep.subr.bf16.mxu0 0
        %1034 = vmatpush1.bf16.msra.mxu0 0
        %1035 = vmatprep.subr.bf16.mxu0 0
        %1036 = vmatpush1.bf16.msra.mxu0 0
        %1037 = vmatprep.subr.bf16.mxu0 0
        %1038 = vmatpush1.bf16.msra.mxu0 0
        %1039 = vmatprep.subr.bf16.mxu0 0
        %1040 = vmatpush1.bf16.msra.mxu0 0
        %1041 = vmatprep.subr.bf16.mxu0 0
        %1042 = vmatpush1.bf16.msra.mxu0 0
        %1043 = vmatprep.subr.bf16.mxu0 0
        %1044 = vmatpush1.bf16.msra.mxu0 0
        %1045 = vmatprep.subr.bf16.mxu0 0
        %1046 = vmatpush1.bf16.msra.mxu0 0
        %1047 = vmatprep.subr.bf16.mxu0 0
        %1048 = vmatpush1.bf16.msra.mxu0 0
        %1049 = vmatprep.subr.bf16.mxu0 0
        %1050 = vmatpush1.bf16.msra.mxu0 0
        %1051 = vmatprep.subr.bf16.mxu0 0
        %1052 = vmatpush1.bf16.msra.mxu0 0
        %1053 = vmatprep.subr.bf16.mxu0 0
        %1054 = vmatpush1.bf16.msra.mxu0 0
        %1055 = vmatprep.subr.bf16.mxu0 0
        %1056 = vmatpush1.bf16.msra.mxu0 0
        %1057 = vmatprep.mubr.bf16.mxu0 0
        %1058 = vmatmul.mubr.bf16.gmra.mrb[0].mxu0 %v968
        %v1059 = vpop.f32.mrb[0].mxu0
        %v1060 = vadd.f32 0.0, %v1059
        %v1061 = vpop.f32.mrb[0].mxu0
        %v1062 = vadd.f32 0.0, %v1061
        %v1063 = vpop.f32.mrb[0].mxu0
        %v1064 = vadd.f32 0.0, %v1063
        %v1065 = vpop.f32.mrb[0].mxu0
        %v1066 = vadd.f32 0.0, %v1065
        %1067 = vdwg.mxu0
        %v1068 = vadd.f32 %v936, %v1017
        %v1069 = vadd.f32 %v937, %v1019
        %v1070 = vadd.f32 %v938, %v1060
        %v1071 = vadd.f32 %v939, %v1062
        %v1072 = vadd.f32 %v940, %v1021
        %v1073 = vadd.f32 %v941, %v1023
        %v1074 = vadd.f32 %v942, %v1064
        %v1075 = vadd.f32 %v943, %v1066
        %s1076 = scalar_lea.vmem %s2, 48
        %v1077 = vld [vmem:[%s1076] sm:$0xf]
        %v1078 = vld [vmem:[%s1076 + $0x4] sm:$0xf]
        %v1081 = vunpack.c.l.b16 %v1077
        %v1082 = vunpack.c.l.b16 %v1078
        %v1083 = vpack.c.b16 %v1082, %v1081
        %1084 = vrot.lane.b32.xlu0 %v303, 18
        %v1085 = vpop.permute.xlu0 %1084
        %1086 = vrot.lane.b32.xlu0 %v311, 18
        %v1087 = vpop.permute.xlu0 %1086
        %1088 = vrot.lane.b32.xlu0 %v310, 18
        %v1089 = vpop.permute.xlu0 %1088
        %1090 = vrot.lane.b32.xlu0 %v312, 18
        %v1091 = vpop.permute.xlu0 %1090
        %1092 = vrot.lane.b32.xlu0 %v294, 18
        %v1093 = vpop.permute.xlu0 %1092
        %vm1094 = vcmask 146432
        %v1095 = vsel %vm1094, %v1085, %v1087
        %v1096 = vsel %vm1094, %v1087, %v1089
        %v1097 = vsel %vm1094, %v1089, %v1091
        %v1098 = vsel %vm1094, %v1091, %v1093
        %v1100 = vsel %vm339, %v1083, 0
        %v1103 = vsel %vm343, %v1095, 0
        %v1106 = vsel %vm343, %v1096, 0
        %v1109 = vsel %vm343, %v1097, 0
        %v1112 = vsel %vm343, %v1098, 0
        %1114 = vmatprep.subr.bf16.mxu0 %v1106
        %1115 = vmatpush1.bf16.msra.mxu0 %v1103
        %1116 = vmatprep.subr.bf16.mxu0 0
        %1117 = vmatpush1.bf16.msra.mxu0 0
        %1118 = vmatprep.subr.bf16.mxu0 0
        %1119 = vmatpush1.bf16.msra.mxu0 0
        %1120 = vmatprep.subr.bf16.mxu0 0
        %1121 = vmatpush1.bf16.msra.mxu0 0
        %1122 = vmatprep.subr.bf16.mxu0 0
        %1123 = vmatpush1.bf16.msra.mxu0 0
        %1124 = vmatprep.subr.bf16.mxu0 0
        %1125 = vmatpush1.bf16.msra.mxu0 0
        %1126 = vmatprep.subr.bf16.mxu0 0
        %1127 = vmatpush1.bf16.msra.mxu0 0
        %1128 = vmatprep.subr.bf16.mxu0 0
        %1129 = vmatpush1.bf16.msra.mxu0 0
        %1130 = vmatprep.subr.bf16.mxu0 0
        %1131 = vmatpush1.bf16.msra.mxu0 0
        %1132 = vmatprep.subr.bf16.mxu0 0
        %1133 = vmatpush1.bf16.msra.mxu0 0
        %1134 = vmatprep.subr.bf16.mxu0 0
        %1135 = vmatpush1.bf16.msra.mxu0 0
        %1136 = vmatprep.subr.bf16.mxu0 0
        %1137 = vmatpush1.bf16.msra.mxu0 0
        %1138 = vmatprep.subr.bf16.mxu0 0
        %1139 = vmatpush1.bf16.msra.mxu0 0
        %1140 = vmatprep.subr.bf16.mxu0 0
        %1141 = vmatpush1.bf16.msra.mxu0 0
        %1142 = vmatprep.subr.bf16.mxu0 0
        %1143 = vmatpush1.bf16.msra.mxu0 0
        %1144 = vmatprep.subr.bf16.mxu0 0
        %1145 = vmatpush1.bf16.msra.mxu0 0
        %1146 = vmatprep.mubr.bf16.mxu0 0
        %1147 = vmatmul.mubr.bf16.gmra.mrb[0].mxu0 %v1100
        %v1148 = vpop.f32.mrb[0].mxu0
        %v1149 = vadd.f32 0.0, %v1148
        %v1150 = vpop.f32.mrb[0].mxu0
        %v1151 = vadd.f32 0.0, %v1150
        %v1152 = vpop.f32.mrb[0].mxu0
        %v1153 = vadd.f32 0.0, %v1152
        %v1154 = vpop.f32.mrb[0].mxu0
        %v1155 = vadd.f32 0.0, %v1154
        %1156 = vdwg.mxu0
        %1157 = vmatprep.subr.bf16.mxu0 %v1112
        %1158 = vmatpush1.bf16.msra.mxu0 %v1109
        %1159 = vmatprep.subr.bf16.mxu0 0
        %1160 = vmatpush1.bf16.msra.mxu0 0
        %1161 = vmatprep.subr.bf16.mxu0 0
        %1162 = vmatpush1.bf16.msra.mxu0 0
        %1163 = vmatprep.subr.bf16.mxu0 0
        %1164 = vmatpush1.bf16.msra.mxu0 0
        %1165 = vmatprep.subr.bf16.mxu0 0
        %1166 = vmatpush1.bf16.msra.mxu0 0
        %1167 = vmatprep.subr.bf16.mxu0 0
        %1168 = vmatpush1.bf16.msra.mxu0 0
        %1169 = vmatprep.subr.bf16.mxu0 0
        %1170 = vmatpush1.bf16.msra.mxu0 0
        %1171 = vmatprep.subr.bf16.mxu0 0
        %1172 = vmatpush1.bf16.msra.mxu0 0
        %1173 = vmatprep.subr.bf16.mxu0 0
        %1174 = vmatpush1.bf16.msra.mxu0 0
        %1175 = vmatprep.subr.bf16.mxu0 0
        %1176 = vmatpush1.bf16.msra.mxu0 0
        %1177 = vmatprep.subr.bf16.mxu0 0
        %1178 = vmatpush1.bf16.msra.mxu0 0
        %1179 = vmatprep.subr.bf16.mxu0 0
        %1180 = vmatpush1.bf16.msra.mxu0 0
        %1181 = vmatprep.subr.bf16.mxu0 0
        %1182 = vmatpush1.bf16.msra.mxu0 0
        %1183 = vmatprep.subr.bf16.mxu0 0
        %1184 = vmatpush1.bf16.msra.mxu0 0
        %1185 = vmatprep.subr.bf16.mxu0 0
        %1186 = vmatpush1.bf16.msra.mxu0 0
        %1187 = vmatprep.subr.bf16.mxu0 0
        %1188 = vmatpush1.bf16.msra.mxu0 0
        %1189 = vmatprep.mubr.bf16.mxu0 0
        %1190 = vmatmul.mubr.bf16.gmra.mrb[0].mxu0 %v1100
        %v1191 = vpop.f32.mrb[0].mxu0
        %v1192 = vadd.f32 0.0, %v1191
        %v1193 = vpop.f32.mrb[0].mxu0
        %v1194 = vadd.f32 0.0, %v1193
        %v1195 = vpop.f32.mrb[0].mxu0
        %v1196 = vadd.f32 0.0, %v1195
        %v1197 = vpop.f32.mrb[0].mxu0
        %v1198 = vadd.f32 0.0, %v1197
        %1199 = vdwg.mxu0
        %v1200 = vadd.f32 %v1068, %v1149
        %v1201 = vadd.f32 %v1069, %v1151
        %v1202 = vadd.f32 %v1070, %v1192
        %v1203 = vadd.f32 %v1071, %v1194
        %v1204 = vadd.f32 %v1072, %v1153
        %v1205 = vadd.f32 %v1073, %v1155
        %v1206 = vadd.f32 %v1074, %v1196
        %v1207 = vadd.f32 %v1075, %v1198
        %s1208 = scalar_lea.vmem %s2, 56
        %v1209 = vld [vmem:[%s1208] sm:$0xf]
        %v1210 = vld [vmem:[%s1208 + $0x4] sm:$0xf]
        %v1213 = vunpack.c.l.b16 %v1209
        %v1214 = vunpack.c.l.b16 %v1210
        %v1215 = vpack.c.b16 %v1214, %v1213
        %1216 = vrot.lane.b32.xlu0 %v303, 17
        %v1217 = vpop.permute.xlu0 %1216
        %1218 = vrot.lane.b32.xlu0 %v311, 17
        %v1219 = vpop.permute.xlu0 %1218
        %1220 = vrot.lane.b32.xlu0 %v310, 17
        %v1221 = vpop.permute.xlu0 %1220
        %1222 = vrot.lane.b32.xlu0 %v312, 17
        %v1223 = vpop.permute.xlu0 %1222
        %1224 = vrot.lane.b32.xlu0 %v294, 17
        %v1225 = vpop.permute.xlu0 %1224
        %vm1226 = vcmask 138240
        %v1227 = vsel %vm1226, %v1217, %v1219
        %v1228 = vsel %vm1226, %v1219, %v1221
        %v1229 = vsel %vm1226, %v1221, %v1223
        %v1230 = vsel %vm1226, %v1223, %v1225
        %v1232 = vsel %vm339, %v1215, 0
        %v1235 = vsel %vm343, %v1227, 0
        %v1238 = vsel %vm343, %v1228, 0
        %v1241 = vsel %vm343, %v1229, 0
        %v1244 = vsel %vm343, %v1230, 0
        %1246 = vmatprep.subr.bf16.mxu0 %v1238
        %1247 = vmatpush1.bf16.msra.mxu0 %v1235
        %1248 = vmatprep.subr.bf16.mxu0 0
        %1249 = vmatpush1.bf16.msra.mxu0 0
        %1250 = vmatprep.subr.bf16.mxu0 0
        %1251 = vmatpush1.bf16.msra.mxu0 0
        %1252 = vmatprep.subr.bf16.mxu0 0
        %1253 = vmatpush1.bf16.msra.mxu0 0
        %1254 = vmatprep.subr.bf16.mxu0 0
        %1255 = vmatpush1.bf16.msra.mxu0 0
        %1256 = vmatprep.subr.bf16.mxu0 0
        %1257 = vmatpush1.bf16.msra.mxu0 0
        %1258 = vmatprep.subr.bf16.mxu0 0
        %1259 = vmatpush1.bf16.msra.mxu0 0
        %1260 = vmatprep.subr.bf16.mxu0 0
        %1261 = vmatpush1.bf16.msra.mxu0 0
        %1262 = vmatprep.subr.bf16.mxu0 0
        %1263 = vmatpush1.bf16.msra.mxu0 0
        %1264 = vmatprep.subr.bf16.mxu0 0
        %1265 = vmatpush1.bf16.msra.mxu0 0
        %1266 = vmatprep.subr.bf16.mxu0 0
        %1267 = vmatpush1.bf16.msra.mxu0 0
        %1268 = vmatprep.subr.bf16.mxu0 0
        %1269 = vmatpush1.bf16.msra.mxu0 0
        %1270 = vmatprep.subr.bf16.mxu0 0
        %1271 = vmatpush1.bf16.msra.mxu0 0
        %1272 = vmatprep.subr.bf16.mxu0 0
        %1273 = vmatpush1.bf16.msra.mxu0 0
        %1274 = vmatprep.subr.bf16.mxu0 0
        %1275 = vmatpush1.bf16.msra.mxu0 0
        %1276 = vmatprep.subr.bf16.mxu0 0
        %1277 = vmatpush1.bf16.msra.mxu0 0
        %1278 = vmatprep.mubr.bf16.mxu0 0
        %1279 = vmatmul.mubr.bf16.gmra.mrb[0].mxu0 %v1232
        %v1280 = vpop.f32.mrb[0].mxu0
        %v1281 = vadd.f32 0.0, %v1280
        %v1282 = vpop.f32.mrb[0].mxu0
        %v1283 = vadd.f32 0.0, %v1282
        %v1284 = vpop.f32.mrb[0].mxu0
        %v1285 = vadd.f32 0.0, %v1284
        %v1286 = vpop.f32.mrb[0].mxu0
        %v1287 = vadd.f32 0.0, %v1286
        %1288 = vdwg.mxu0
        %1289 = vmatprep.subr.bf16.mxu0 %v1244
        %1290 = vmatpush1.bf16.msra.mxu0 %v1241
        %1291 = vmatprep.subr.bf16.mxu0 0
        %1292 = vmatpush1.bf16.msra.mxu0 0
        %1293 = vmatprep.subr.bf16.mxu0 0
        %1294 = vmatpush1.bf16.msra.mxu0 0
        %1295 = vmatprep.subr.bf16.mxu0 0
        %1296 = vmatpush1.bf16.msra.mxu0 0
        %1297 = vmatprep.subr.bf16.mxu0 0
        %1298 = vmatpush1.bf16.msra.mxu0 0
        %1299 = vmatprep.subr.bf16.mxu0 0
        %1300 = vmatpush1.bf16.msra.mxu0 0
        %1301 = vmatprep.subr.bf16.mxu0 0
        %1302 = vmatpush1.bf16.msra.mxu0 0
        %1303 = vmatprep.subr.bf16.mxu0 0
        %1304 = vmatpush1.bf16.msra.mxu0 0
        %1305 = vmatprep.subr.bf16.mxu0 0
        %1306 = vmatpush1.bf16.msra.mxu0 0
        %1307 = vmatprep.subr.bf16.mxu0 0
        %1308 = vmatpush1.bf16.msra.mxu0 0
        %1309 = vmatprep.subr.bf16.mxu0 0
        %1310 = vmatpush1.bf16.msra.mxu0 0
        %1311 = vmatprep.subr.bf16.mxu0 0
        %1312 = vmatpush1.bf16.msra.mxu0 0
        %1313 = vmatprep.subr.bf16.mxu0 0
        %1314 = vmatpush1.bf16.msra.mxu0 0
        %1315 = vmatprep.subr.bf16.mxu0 0
        %1316 = vmatpush1.bf16.msra.mxu0 0
        %1317 = vmatprep.subr.bf16.mxu0 0
        %1318 = vmatpush1.bf16.msra.mxu0 0
        %1319 = vmatprep.subr.bf16.mxu0 0
        %1320 = vmatpush1.bf16.msra.mxu0 0
        %1321 = vmatprep.mubr.bf16.mxu0 0
        %1322 = vmatmul.mubr.bf16.gmra.mrb[0].mxu0 %v1232
        %v1323 = vpop.f32.mrb[0].mxu0
        %v1324 = vadd.f32 0.0, %v1323
        %v1325 = vpop.f32.mrb[0].mxu0
        %v1326 = vadd.f32 0.0, %v1325
        %v1327 = vpop.f32.mrb[0].mxu0
        %v1328 = vadd.f32 0.0, %v1327
        %v1329 = vpop.f32.mrb[0].mxu0
        %v1330 = vadd.f32 0.0, %v1329
        %1331 = vdwg.mxu0
        %v1332 = vadd.f32 %v1200, %v1281
        %v1333 = vadd.f32 %v1201, %v1283
        %v1334 = vadd.f32 %v1202, %v1324
        %v1335 = vadd.f32 %v1203, %v1326
        %v1336 = vadd.f32 %v1204, %v1285
        %v1337 = vadd.f32 %v1205, %v1287
        %v1338 = vadd.f32 %v1206, %v1328
        %v1339 = vadd.f32 %v1207, %v1330
        %v1340 = vld [vmem:[%s3] sm:$0xff]
        %v1341 = vld [vmem:[%s3 + $0x8] sm:$0xff]
        %1343 = vset.pattern.permute.xlu0 0
        %1344 = vperm.xlu0 %1343, %v1340
        %v1345 = vpop.permute.xlu0 %1344
        %1348 = vset.pattern.permute.xlu0 0
        %1349 = vperm.xlu0 %1348, %v1341
        %v1350 = vpop.permute.xlu0 %1349
        %v1352 = vadd.f32 %v1332, %v1345
        %v1353 = vadd.f32 %v1333, %v1345
        %v1354 = vadd.f32 %v1334, %v1345
        %v1355 = vadd.f32 %v1335, %v1345
        %v1356 = vadd.f32 %v1336, %v1350
        %v1357 = vadd.f32 %v1337, %v1350
        %v1358 = vadd.f32 %v1338, %v1350
        %v1359 = vadd.f32 %v1339, %v1350
        %v1360 = vmax.f32 %v1352, 0.0
        %v1361 = vmax.f32 %v1353, 0.0
        %v1362 = vmax.f32 %v1354, 0.0
        %v1363 = vmax.f32 %v1355, 0.0
        %v1364 = vmax.f32 %v1356, 0.0
        %v1365 = vmax.f32 %v1357, 0.0
        %v1366 = vmax.f32 %v1358, 0.0
        %v1367 = vmax.f32 %v1359, 0.0
        %v1368 = vpack.c.bf16 %v1364, %v1360
        %v1369 = vpack.c.bf16 %v1365, %v1361
        %v1370 = vpack.c.bf16 %v1366, %v1362
        %v1371 = vpack.c.bf16 %v1367, %v1363
        %v1376 = vunpack.c.l.b16 %v1368
        %v1377 = vunpack.c.l.b16 %v1369
        %v1378 = vunpack.c.l.b16 %v1370
        %v1379 = vunpack.c.l.b16 %v1371
        %v1380 = vunpack.c.h.b16 %v1368
        %v1381 = vunpack.c.h.b16 %v1369
        %v1382 = vunpack.c.h.b16 %v1370
        %v1383 = vunpack.c.h.b16 %v1371
        %v1384 = vpack.c.b16 %v1377, %v1376
        %v1385 = vpack.c.b16 %v1379, %v1378
        %v1386 = vpack.c.b16 %v1381, %v1380
        %v1387 = vpack.c.b16 %v1383, %v1382
        %1392 = vst [vmem:[%s260] sm:$0xff] %v1384
        %1393 = vst [vmem:[%s260 + $0x8] sm:$0xff] %v1385
        %1394 = vst [vmem:[%s260 + $0x10] sm:$0xff] %v1386
        %1395 = vst [vmem:[%s260 + $0x18] sm:$0xff] %v1387
        %s1396 = sand.u32 %s142, 1
        %s1397 = scalar_lea.sflag [#allocation3], %s1396
        %s1398 = sand.u32 %s142, 1
        %s1399 = smul.addr %s1398, 32
        %s1400 = scalar_lea.vmem [#allocation2], %s1399
        // Predicated region
        $region37: #{tpu_custom_call.1} parent=35 // pred_check
          %p1401 = pneg %p152
        $region38: #{tpu_custom_call.1} parent=35 // pred_check_branch
          %1403 = sbr.rel (%p1401) target = $region40
        $region39: #{tpu_custom_call.1} parent=35 // pred_region
          %s1404 = smul.u32 4, %s23
          %s1406 = ssub.s32 512, 512
          %1407 = vsyncadd %s1397, %s1406
          %s1408 = smul.addr %s22, 16
          %s1409 = sadd.s32 %s1404, %s1408
          %s1410 = smul.addr %s1409, 64
          %s1411 = scalar_lea.hbm %s4, %s1410
          %s1412 = sshll.u32 %s1400, 4
          %s1413 = int_to_ptr.vmem [resolvable:$true] %s1412
          %1418 = dma.vmem_to_hbm [thread:$0]  %s1413, 512, %s1411, %s1397, 256, 512, 16
        $region40: #{tpu_custom_call.1} parent=35 // pred_fallthru
          _
      $region36: #{tpu_custom_call.1} parent=5 // pred_fallthru
        _
      %p1419 = scmp.le.s32.totalorder 2, %s13
      // Predicated region
      $region41: #{tpu_custom_call.1} parent=5 // pred_check
        %p1420 = pneg %p1419
      $region42: #{tpu_custom_call.1} parent=5 // pred_check_branch
        %1422 = sbr.rel (%p1420) target = $region44
      $region43: #{tpu_custom_call.1} parent=5 // pred_region
        %s1423 = ssub.s32 %s13, 2
        // Predicated region
        $region45: #{tpu_custom_call.1} parent=43 // pred_check
          %p1424 = pneg %p158
        $region46: #{tpu_custom_call.1} parent=43 // pred_check_branch
          %1426 = sbr.rel (%p1424) target = $region48
        $region47: #{tpu_custom_call.1} parent=43 // pred_region
          %s1427 = sand.u32 %s143, 1
          %s1428 = scalar_lea.sflag [#allocation3], %s1427
          %s1429 = sand.u32 %s143, 1
          %s1430 = smul.addr %s1429, 32
          %s1431 = scalar_lea.vmem [#allocation2], %s1430
          %1432 = dma.done %s1428, 512
        $region48: #{tpu_custom_call.1} parent=43 // pred_fallthru
          _
      $region44: #{tpu_custom_call.1} parent=5 // pred_fallthru
        _
    $region6: #{tpu_custom_call.1} parent=1 // loop_footer
      %s17 = sadd.s32 1, %s13
    $region7: #{tpu_custom_call.1} parent=1 // loop_footer_branch
      %12 = sbr.rel target = $region3
    $region8: #{tpu_custom_call.1} parent=1 // loop_exit
      _
    %1433 = vsyncpa [#allocation3], 1
    %s1434 = scalar_lea.sflag [#allocation3], 1
    %1435 = vsyncpa %s1434, 1

</llo_original>
